<compile_context>
chip_gen: v7x
topology: tpu7x:2x2x1
jax: 0.10.0
libtpu: 0.0.40
codegen_flags: <defaults>
</compile_context>

<pallas_src>
import jax
import jax.numpy as jnp
from jax import lax
from jax.experimental import pallas as pl
from jax.experimental.pallas import tpu as pltpu

# ---------------- problem sizes (small, consistent with the module) -------------
B = 2           # batch
I = 16          # x sequence length
J = 16          # context sequence length
DIM = 32        # x feature dim
CTX_DIM = 48    # context feature dim
HEADS = 2
DIM_HEAD = 32
INNER = HEADS * DIM_HEAD        # 64
SCALE = DIM_HEAD ** (-0.5)


def _bca_kernel(x_ref, ctx_ref,
                wx_ref, wc_ref,
                wout_ref, bout_ref, wcout_ref, bcout_ref,
                out_ref, cout_ref):
    # Whole problem (all batches) handled in one invocation.
    x = x_ref[...].reshape(B * I, DIM)         # (B*I, DIM)
    c = ctx_ref[...].reshape(B * J, CTX_DIM)   # (B*J, CTX_DIM)

    # Fused input projections: one 128-lane-wide matmul per input stream.
    proj_x = jnp.dot(x, wx_ref[...], preferred_element_type=jnp.float32)   # (B*I, 2*INNER)
    proj_c = jnp.dot(c, wc_ref[...], preferred_element_type=jnp.float32)   # (B*J, 2*INNER)

    w_out = wout_ref[...]      # (INNER, DIM)
    w_cout = wcout_ref[...]    # (INNER, CTX_DIM)
    b_out = bout_ref[...]      # (1, DIM)
    b_cout = bcout_ref[...]    # (1, CTX_DIM)

    # B and HEADS are tiny static constants -> fully unrolled Python loops;
    # all slices below are static (free lane/sublane offsets).
    for b in range(B):
        qk = proj_x[b * I:(b + 1) * I, 0:INNER]            # (I, INNER)
        v = proj_x[b * I:(b + 1) * I, INNER:2 * INNER]     # (I, INNER)
        cqk = proj_c[b * J:(b + 1) * J, 0:INNER]           # (J, INNER)
        cv = proj_c[b * J:(b + 1) * J, INNER:2 * INNER]    # (J, INNER)

        out_acc = jnp.zeros((I, DIM), jnp.float32)
        cout_acc = jnp.zeros((J, CTX_DIM), jnp.float32)

        for h in range(HEADS):
            sl = slice(h * DIM_HEAD, (h + 1) * DIM_HEAD)
            qh, ckh = qk[:, sl], cqk[:, sl]      # (I, d), (J, d)
            vh, cvh = v[:, sl], cv[:, sl]        # (I, d), (J, d)

            # sim[i, j] = <q_i, ck_j> * scale   (contract on d, no transpose)
            sim = lax.dot_general(
                qh, ckh, (((1,), (1,)), ((), ())),
                preferred_element_type=jnp.float32) * SCALE           # (I, J)

            # Shared-exponential dual softmax: softmax is shift-invariant, so
            # a single global max works for both the row (j) and column (i)
            # normalizations -> one exp per head instead of two.
            e = jnp.exp(sim - jnp.max(sim))
            inv_row = pl.reciprocal(jnp.sum(e, axis=-1, keepdims=True),
                                    approx=True)                       # (I, 1)
            inv_col = pl.reciprocal(jnp.sum(e, axis=-2, keepdims=True),
                                    approx=True)                       # (1, J)
            attn = e * inv_row            # softmax over j
            context_attn = e * inv_col    # softmax over i

            # out_h   = attn @ cv_h                        -> (I, d)
            # cout_h  = context_attn^T @ v_h  (contract i) -> (J, d)
            out_h = jnp.dot(attn, cvh, preferred_element_type=jnp.float32)
            cout_h = lax.dot_general(
                context_attn, vh, (((0,), (0,)), ((), ())),
                preferred_element_type=jnp.float32)

            # Fold the head-concat into the output projections via per-head
            # accumulation against static row-slices of the output weights.
            out_acc = out_acc + jnp.dot(out_h, w_out[sl, :],
                                        preferred_element_type=jnp.float32)
            cout_acc = cout_acc + jnp.dot(cout_h, w_cout[sl, :],
                                          preferred_element_type=jnp.float32)

        out_ref[b] = out_acc + b_out
        cout_ref[b] = cout_acc + b_cout


def bidirectional_cross_attention(x, context, params):
    """x: (B, I, DIM) f32, context: (B, J, CTX_DIM) f32 -> (out, context_out)."""
    w_qk, w_cqk, w_v, w_cv, w_out, b_out, w_cout, b_cout = params

    # Fuse the qk/v and cqk/cv projection weights -> 128-lane-wide matmuls.
    w_x = jnp.concatenate([w_qk, w_v], axis=-1)      # (DIM, 2*INNER) = (32, 128)
    w_c = jnp.concatenate([w_cqk, w_cv], axis=-1)    # (CTX_DIM, 2*INNER) = (48, 128)

    def full(shape):
        return pl.BlockSpec(shape, lambda i, _s=shape: tuple(0 for _ in _s))

    flops = 2 * (B * I * DIM * 2 * INNER
                 + B * J * CTX_DIM * 2 * INNER
                 + B * HEADS * 3 * I * J * DIM_HEAD
                 + B * I * INNER * DIM
                 + B * J * INNER * CTX_DIM)
    bytes_accessed = 4 * (x.size + context.size + w_x.size + w_c.size
                          + w_out.size + b_out.size + w_cout.size + b_cout.size
                          + B * I * DIM + B * J * CTX_DIM)
    cost = pl.CostEstimate(flops=flops,
                           transcendentals=B * HEADS * I * J,
                           bytes_accessed=bytes_accessed)

    # Single grid step: at B=2 the whole working set (~70 KB) fits in VMEM and
    # per-step pipeline overhead dominates -> collapse the batch grid.
    # NOTE: for much larger B on v7x, prefer grid=(B,) with ("parallel",) so the
    # second TensorCore gets work; irrelevant at this size.
    grid_spec = pltpu.PrefetchScalarGridSpec(
        num_scalar_prefetch=0,
        grid=(1,),
        in_specs=[
            full((B, I, DIM)),
            full((B, J, CTX_DIM)),
            full((DIM, 2 * INNER)),
            full((CTX_DIM, 2 * INNER)),
            full((INNER, DIM)),
            full((1, DIM)),
            full((INNER, CTX_DIM)),
            full((1, CTX_DIM)),
        ],
        out_specs=[
            full((B, I, DIM)),
            full((B, J, CTX_DIM)),
        ],
    )

    out, context_out = pl.pallas_call(
        _bca_kernel,
        out_shape=(
            jax.ShapeDtypeStruct((B, I, DIM), jnp.float32),
            jax.ShapeDtypeStruct((B, J, CTX_DIM), jnp.float32),
        ),
        grid_spec=grid_spec,
        compiler_params=pltpu.CompilerParams(
            dimension_semantics=("arbitrary",)),
        cost_estimate=cost,
    )(x, context, w_x, w_c, w_out, b_out, w_cout, b_cout)
    return out, context_out


def _reference(x, context, params):
    """Pure-JAX reference of the PyTorch forward (prenorm/dropout/talking_heads off)."""
    w_qk, w_cqk, w_v, w_cv, w_out, b_out, w_cout, b_cout = params
    qk = x @ w_qk
    v = x @ w_v
    cqk = context @ w_cqk
    cv = context @ w_cv

    def split_heads(t):  # (B, N, H*D) -> (B, H, N, D)
        b, n, _ = t.shape
        return t.reshape(b, n, HEADS, DIM_HEAD).transpose(0, 2, 1, 3)

    qk, cqk, v, cv = map(split_heads, (qk, cqk, v, cv))
    sim = jnp.einsum("bhid,bhjd->bhij", qk, cqk) * SCALE
    attn = jax.nn.softmax(sim, axis=-1)
    context_attn = jax.nn.softmax(sim, axis=-2)
    out = jnp.einsum("bhij,bhjd->bhid", attn, cv)
    context_out = jnp.einsum("bhji,bhjd->bhid", context_attn, v)

    def merge_heads(t):  # (B, H, N, D) -> (B, N, H*D)
        b, h, n, d = t.shape
        return t.transpose(0, 2, 1, 3).reshape(b, n, h * d)

    out = merge_heads(out) @ w_out + b_out[0]
    context_out = merge_heads(context_out) @ w_cout + b_cout[0]
    return out, context_out


def _make_params(key):
    keys = jax.random.split(key, 8)
    s = 0.05
    w_qk = jax.random.normal(keys[0], (DIM, INNER), jnp.float32) * s
    w_cqk = jax.random.normal(keys[1], (CTX_DIM, INNER), jnp.float32) * s
    w_v = jax.random.normal(keys[2], (DIM, INNER), jnp.float32) * s
    w_cv = jax.random.normal(keys[3], (CTX_DIM, INNER), jnp.float32) * s
    w_out = jax.random.normal(keys[4], (INNER, DIM), jnp.float32) * s
    b_out = jax.random.normal(keys[5], (1, DIM), jnp.float32) * s
    w_cout = jax.random.normal(keys[6], (INNER, CTX_DIM), jnp.float32) * s
    b_cout = jax.random.normal(keys[7], (1, CTX_DIM), jnp.float32) * s
    return (w_qk, w_cqk, w_v, w_cv, w_out, b_out, w_cout, b_cout)


if __name__ == "__main__":
    key = jax.random.PRNGKey(0)
    kx, kc, kp = jax.random.split(key, 3)
    x = jax.random.normal(kx, (B, I, DIM), jnp.float32)
    context = jax.random.normal(kc, (B, J, CTX_DIM), jnp.float32)
    params = _make_params(kp)

    # TODO(synk): mask / context_mask / rel_pos_bias / return_attn paths not
    # implemented (defaults None/False in the reference forward).

    out, context_out = jax.block_until_ready(
        bidirectional_cross_attention(x, context, params))

    ref_out, ref_cout = _reference(x, context, params)
    # Tolerance relaxed vs. 1e-4: approx-reciprocal softmax denominators and the
    # shared-exp formulation introduce ~1e-4-relative drift.
    assert jnp.allclose(out, ref_out, atol=2e-3, rtol=2e-3)
    assert jnp.allclose(context_out, ref_cout, atol=2e-3, rtol=2e-3)
    print("KERNEL_OK")
</pallas_src>

<mosaic_0001>
module attributes {stable_mosaic.version = 11 : i64} {
  func.func @_bca_kernel(%arg0: i32, %arg1: memref<2x16x32xf32, #tpu.memory_space<vmem>>, %arg2: memref<2x16x48xf32, #tpu.memory_space<vmem>>, %arg3: memref<32x128xf32, #tpu.memory_space<vmem>>, %arg4: memref<48x128xf32, #tpu.memory_space<vmem>>, %arg5: memref<64x32xf32, #tpu.memory_space<vmem>>, %arg6: memref<1x32xf32, #tpu.memory_space<vmem>>, %arg7: memref<64x48xf32, #tpu.memory_space<vmem>>, %arg8: memref<1x48xf32, #tpu.memory_space<vmem>>, %arg9: memref<2x16x32xf32, #tpu.memory_space<vmem>>, %arg10: memref<2x16x48xf32, #tpu.memory_space<vmem>>) attributes {dimension_semantics = [#tpu.dimension_semantics<arbitrary>], iteration_bounds = array<i64: 1>, scalar_prefetch = 0 : i64, scratch_operands = 0 : i64, tpu.core_type = #tpu.core_type<tc>, window_params = [{pipeline_mode = #tpu.pipeline_mode<synchronous>, transform_indices = @transform_0, window_bounds = array<i64: 2, 16, 32>}, {pipeline_mode = #tpu.pipeline_mode<synchronous>, transform_indices = @transform_1, window_bounds = array<i64: 2, 16, 48>}, {pipeline_mode = #tpu.pipeline_mode<synchronous>, transform_indices = @transform_2, window_bounds = array<i64: 32, 128>}, {pipeline_mode = #tpu.pipeline_mode<synchronous>, transform_indices = @transform_3, window_bounds = array<i64: 48, 128>}, {pipeline_mode = #tpu.pipeline_mode<synchronous>, transform_indices = @transform_4, window_bounds = array<i64: 64, 32>}, {pipeline_mode = #tpu.pipeline_mode<synchronous>, transform_indices = @transform_5, window_bounds = array<i64: 1, 32>}, {pipeline_mode = #tpu.pipeline_mode<synchronous>, transform_indices = @transform_6, window_bounds = array<i64: 64, 48>}, {pipeline_mode = #tpu.pipeline_mode<synchronous>, transform_indices = @transform_7, window_bounds = array<i64: 1, 48>}, {pipeline_mode = #tpu.pipeline_mode<synchronous>, transform_indices = @transform_8, window_bounds = array<i64: 2, 16, 32>}, {pipeline_mode = #tpu.pipeline_mode<synchronous>, transform_indices = @transform_9, window_bounds = array<i64: 2, 16, 48>}]} {
    %c0 = arith.constant 0 : index
    %c0_0 = arith.constant 0 : index
    %c0_1 = arith.constant 0 : index
    %0 = vector.load %arg1[%c0, %c0_0, %c0_1] : memref<2x16x32xf32, #tpu.memory_space<vmem>>, vector<2x16x32xf32>
    %1 = vector.shape_cast %0 : vector<2x16x32xf32> to vector<32x32xf32>
    %c0_2 = arith.constant 0 : index
    %c0_3 = arith.constant 0 : index
    %c0_4 = arith.constant 0 : index
    %2 = vector.load %arg2[%c0_2, %c0_3, %c0_4] : memref<2x16x48xf32, #tpu.memory_space<vmem>>, vector<2x16x48xf32>
    %3 = vector.shape_cast %2 : vector<2x16x48xf32> to vector<32x48xf32>
    %c0_5 = arith.constant 0 : index
    %c0_6 = arith.constant 0 : index
    %4 = vector.load %arg3[%c0_5, %c0_6] : memref<32x128xf32, #tpu.memory_space<vmem>>, vector<32x128xf32>
    %cst = arith.constant dense<0.000000e+00> : vector<32x128xf32>
    %5 = tpu.matmul %1, %4, %cst {dimension_numbers = #tpu.dot_dimension_numbers<[1], [0], [0], [1], [0, 0, 1, 1], [], []>} : vector<32x32xf32>, vector<32x128xf32>, vector<32x128xf32> -> vector<32x128xf32>
    %c0_7 = arith.constant 0 : index
    %c0_8 = arith.constant 0 : index
    %6 = vector.load %arg4[%c0_7, %c0_8] : memref<48x128xf32, #tpu.memory_space<vmem>>, vector<48x128xf32>
    %cst_9 = arith.constant dense<0.000000e+00> : vector<32x128xf32>
    %7 = tpu.matmul %3, %6, %cst_9 {dimension_numbers = #tpu.dot_dimension_numbers<[1], [0], [0], [1], [0, 0, 1, 1], [], []>} : vector<32x48xf32>, vector<48x128xf32>, vector<32x128xf32> -> vector<32x128xf32>
    %c0_10 = arith.constant 0 : index
    %c0_11 = arith.constant 0 : index
    %8 = vector.load %arg5[%c0_10, %c0_11] : memref<64x32xf32, #tpu.memory_space<vmem>>, vector<64x32xf32>
    %c0_12 = arith.constant 0 : index
    %c0_13 = arith.constant 0 : index
    %9 = vector.load %arg7[%c0_12, %c0_13] : memref<64x48xf32, #tpu.memory_space<vmem>>, vector<64x48xf32>
    %c0_14 = arith.constant 0 : index
    %c0_15 = arith.constant 0 : index
    %10 = vector.load %arg6[%c0_14, %c0_15] : memref<1x32xf32, #tpu.memory_space<vmem>>, vector<1x32xf32>
    %c0_16 = arith.constant 0 : index
    %c0_17 = arith.constant 0 : index
    %11 = vector.load %arg8[%c0_16, %c0_17] : memref<1x48xf32, #tpu.memory_space<vmem>>, vector<1x48xf32>
    %12 = vector.extract_strided_slice %5 {offsets = [0, 0], sizes = [16, 64], strides = [1, 1]} : vector<32x128xf32> to vector<16x64xf32>
    %13 = vector.extract_strided_slice %5 {offsets = [0, 64], sizes = [16, 64], strides = [1, 1]} : vector<32x128xf32> to vector<16x64xf32>
    %14 = vector.extract_strided_slice %7 {offsets = [0, 0], sizes = [16, 64], strides = [1, 1]} : vector<32x128xf32> to vector<16x64xf32>
    %15 = vector.extract_strided_slice %7 {offsets = [0, 64], sizes = [16, 64], strides = [1, 1]} : vector<32x128xf32> to vector<16x64xf32>
    %cst_18 = arith.constant 0.000000e+00 : f32
    %16 = vector.broadcast %cst_18 : f32 to vector<16x32xf32>
    %cst_19 = arith.constant 0.000000e+00 : f32
    %17 = vector.broadcast %cst_19 : f32 to vector<16x48xf32>
    %18 = vector.extract_strided_slice %12 {offsets = [0, 0], sizes = [16, 32], strides = [1, 1]} : vector<16x64xf32> to vector<16x32xf32>
    %19 = vector.extract_strided_slice %14 {offsets = [0, 0], sizes = [16, 32], strides = [1, 1]} : vector<16x64xf32> to vector<16x32xf32>
    %20 = vector.extract_strided_slice %13 {offsets = [0, 0], sizes = [16, 32], strides = [1, 1]} : vector<16x64xf32> to vector<16x32xf32>
    %21 = vector.extract_strided_slice %15 {offsets = [0, 0], sizes = [16, 32], strides = [1, 1]} : vector<16x64xf32> to vector<16x32xf32>
    %cst_20 = arith.constant dense<0.000000e+00> : vector<16x16xf32>
    %22 = tpu.matmul %18, %19, %cst_20 {dimension_numbers = #tpu.dot_dimension_numbers<[1], [1], [0], [0], [0, 0, 1, 0], [], []>} : vector<16x32xf32>, vector<16x32xf32>, vector<16x16xf32> -> vector<16x16xf32>
    %cst_21 = arith.constant 0.176776692 : f32
    %23 = vector.broadcast %cst_21 : f32 to vector<16x16xf32>
    %24 = arith.mulf %22, %23 : vector<16x16xf32>
    %25 = vector.shape_cast %24 : vector<16x16xf32> to vector<1x16x16xf32>
    %cst_22 = arith.constant dense<0xFF800000> : vector<1xf32>
    %26 = vector.multi_reduction <maximumf>, %25, %cst_22 [1, 2] : vector<1x16x16xf32> to vector<1xf32>
    %27 = vector.shape_cast %26 : vector<1xf32> to vector<1x1x1xf32>
    %28 = vector.extract %27[0, 0, 0] : f32 from vector<1x1x1xf32>
    %29 = vector.broadcast %28 : f32 to vector<16x16xf32>
    %30 = arith.subf %24, %29 : vector<16x16xf32>
    %31 = math.exp %30 : vector<16x16xf32>
    %cst_23 = arith.constant dense<0.000000e+00> : vector<16xf32>
    %32 = vector.multi_reduction <add>, %31, %cst_23 [1] : vector<16x16xf32> to vector<16xf32>
    %33 = vector.shape_cast %32 : vector<16xf32> to vector<16x1xf32>
    %34 = tpu.reciprocal %33 {approx = true} : vector<16x1xf32> -> vector<16x1xf32>
    %cst_24 = arith.constant dense<0.000000e+00> : vector<16xf32>
    %35 = vector.multi_reduction <add>, %31, %cst_24 [0] : vector<16x16xf32> to vector<16xf32>
    %36 = vector.shape_cast %35 : vector<16xf32> to vector<1x16xf32>
    %37 = tpu.reciprocal %36 {approx = true} : vector<1x16xf32> -> vector<1x16xf32>
    %38 = vector.broadcast %34 : vector<16x1xf32> to vector<16x16xf32>
    %39 = arith.mulf %31, %38 : vector<16x16xf32>
    %40 = vector.broadcast %37 : vector<1x16xf32> to vector<16x16xf32>
    %41 = arith.mulf %31, %40 : vector<16x16xf32>
    %cst_25 = arith.constant dense<0.000000e+00> : vector<16x32xf32>
    %42 = tpu.matmul %39, %21, %cst_25 {dimension_numbers = #tpu.dot_dimension_numbers<[1], [0], [0], [1], [0, 0, 1, 1], [], []>} : vector<16x16xf32>, vector<16x32xf32>, vector<16x32xf32> -> vector<16x32xf32>
    %cst_26 = arith.constant dense<0.000000e+00> : vector<16x32xf32>
    %43 = tpu.matmul %41, %20, %cst_26 {dimension_numbers = #tpu.dot_dimension_numbers<[0], [0], [1], [1], [0, 1, 1, 1], [], []>} : vector<16x16xf32>, vector<16x32xf32>, vector<16x32xf32> -> vector<16x32xf32>
    %44 = vector.extract_strided_slice %8 {offsets = [0, 0], sizes = [32, 32], strides = [1, 1]} : vector<64x32xf32> to vector<32x32xf32>
    %cst_27 = arith.constant dense<0.000000e+00> : vector<16x32xf32>
    %45 = tpu.matmul %42, %44, %cst_27 {dimension_numbers = #tpu.dot_dimension_numbers<[1], [0], [0], [1], [0, 0, 1, 1], [], []>} : vector<16x32xf32>, vector<32x32xf32>, vector<16x32xf32> -> vector<16x32xf32>
    %46 = arith.addf %16, %45 : vector<16x32xf32>
    %47 = vector.extract_strided_slice %9 {offsets = [0, 0], sizes = [32, 48], strides = [1, 1]} : vector<64x48xf32> to vector<32x48xf32>
    %cst_28 = arith.constant dense<0.000000e+00> : vector<16x48xf32>
    %48 = tpu.matmul %43, %47, %cst_28 {dimension_numbers = #tpu.dot_dimension_numbers<[1], [0], [0], [1], [0, 0, 1, 1], [], []>} : vector<16x32xf32>, vector<32x48xf32>, vector<16x48xf32> -> vector<16x48xf32>
    %49 = arith.addf %17, %48 : vector<16x48xf32>
    %50 = vector.extract_strided_slice %12 {offsets = [0, 32], sizes = [16, 32], strides = [1, 1]} : vector<16x64xf32> to vector<16x32xf32>
    %51 = vector.extract_strided_slice %14 {offsets = [0, 32], sizes = [16, 32], strides = [1, 1]} : vector<16x64xf32> to vector<16x32xf32>
    %52 = vector.extract_strided_slice %13 {offsets = [0, 32], sizes = [16, 32], strides = [1, 1]} : vector<16x64xf32> to vector<16x32xf32>
    %53 = vector.extract_strided_slice %15 {offsets = [0, 32], sizes = [16, 32], strides = [1, 1]} : vector<16x64xf32> to vector<16x32xf32>
    %cst_29 = arith.constant dense<0.000000e+00> : vector<16x16xf32>
    %54 = tpu.matmul %50, %51, %cst_29 {dimension_numbers = #tpu.dot_dimension_numbers<[1], [1], [0], [0], [0, 0, 1, 0], [], []>} : vector<16x32xf32>, vector<16x32xf32>, vector<16x16xf32> -> vector<16x16xf32>
    %cst_30 = arith.constant 0.176776692 : f32
    %55 = vector.broadcast %cst_30 : f32 to vector<16x16xf32>
    %56 = arith.mulf %54, %55 : vector<16x16xf32>
    %57 = vector.shape_cast %56 : vector<16x16xf32> to vector<1x16x16xf32>
    %cst_31 = arith.constant dense<0xFF800000> : vector<1xf32>
    %58 = vector.multi_reduction <maximumf>, %57, %cst_31 [1, 2] : vector<1x16x16xf32> to vector<1xf32>
    %59 = vector.shape_cast %58 : vector<1xf32> to vector<1x1x1xf32>
    %60 = vector.extract %59[0, 0, 0] : f32 from vector<1x1x1xf32>
    %61 = vector.broadcast %60 : f32 to vector<16x16xf32>
    %62 = arith.subf %56, %61 : vector<16x16xf32>
    %63 = math.exp %62 : vector<16x16xf32>
    %cst_32 = arith.constant dense<0.000000e+00> : vector<16xf32>
    %64 = vector.multi_reduction <add>, %63, %cst_32 [1] : vector<16x16xf32> to vector<16xf32>
    %65 = vector.shape_cast %64 : vector<16xf32> to vector<16x1xf32>
    %66 = tpu.reciprocal %65 {approx = true} : vector<16x1xf32> -> vector<16x1xf32>
    %cst_33 = arith.constant dense<0.000000e+00> : vector<16xf32>
    %67 = vector.multi_reduction <add>, %63, %cst_33 [0] : vector<16x16xf32> to vector<16xf32>
    %68 = vector.shape_cast %67 : vector<16xf32> to vector<1x16xf32>
    %69 = tpu.reciprocal %68 {approx = true} : vector<1x16xf32> -> vector<1x16xf32>
    %70 = vector.broadcast %66 : vector<16x1xf32> to vector<16x16xf32>
    %71 = arith.mulf %63, %70 : vector<16x16xf32>
    %72 = vector.broadcast %69 : vector<1x16xf32> to vector<16x16xf32>
    %73 = arith.mulf %63, %72 : vector<16x16xf32>
    %cst_34 = arith.constant dense<0.000000e+00> : vector<16x32xf32>
    %74 = tpu.matmul %71, %53, %cst_34 {dimension_numbers = #tpu.dot_dimension_numbers<[1], [0], [0], [1], [0, 0, 1, 1], [], []>} : vector<16x16xf32>, vector<16x32xf32>, vector<16x32xf32> -> vector<16x32xf32>
    %cst_35 = arith.constant dense<0.000000e+00> : vector<16x32xf32>
    %75 = tpu.matmul %73, %52, %cst_35 {dimension_numbers = #tpu.dot_dimension_numbers<[0], [0], [1], [1], [0, 1, 1, 1], [], []>} : vector<16x16xf32>, vector<16x32xf32>, vector<16x32xf32> -> vector<16x32xf32>
    %76 = vector.extract_strided_slice %8 {offsets = [32, 0], sizes = [32, 32], strides = [1, 1]} : vector<64x32xf32> to vector<32x32xf32>
    %cst_36 = arith.constant dense<0.000000e+00> : vector<16x32xf32>
    %77 = tpu.matmul %74, %76, %cst_36 {dimension_numbers = #tpu.dot_dimension_numbers<[1], [0], [0], [1], [0, 0, 1, 1], [], []>} : vector<16x32xf32>, vector<32x32xf32>, vector<16x32xf32> -> vector<16x32xf32>
    %78 = arith.addf %46, %77 : vector<16x32xf32>
    %79 = vector.extract_strided_slice %9 {offsets = [32, 0], sizes = [32, 48], strides = [1, 1]} : vector<64x48xf32> to vector<32x48xf32>
    %cst_37 = arith.constant dense<0.000000e+00> : vector<16x48xf32>
    %80 = tpu.matmul %75, %79, %cst_37 {dimension_numbers = #tpu.dot_dimension_numbers<[1], [0], [0], [1], [0, 0, 1, 1], [], []>} : vector<16x32xf32>, vector<32x48xf32>, vector<16x48xf32> -> vector<16x48xf32>
    %81 = arith.addf %49, %80 : vector<16x48xf32>
    %82 = vector.broadcast %10 : vector<1x32xf32> to vector<16x32xf32>
    %83 = arith.addf %78, %82 : vector<16x32xf32>
    %c0_38 = arith.constant 0 : index
    %c0_39 = arith.constant 0 : index
    %c0_40 = arith.constant 0 : index
    %84 = vector.load %arg9[%c0_38, %c0_39, %c0_40] : memref<2x16x32xf32, #tpu.memory_space<vmem>>, vector<1x16x32xf32>
    %85 = vector.shape_cast %84 : vector<1x16x32xf32> to vector<16x32xf32>
    %86 = vector.shape_cast %83 : vector<16x32xf32> to vector<1x16x32xf32>
    tpu.vector_store %arg9[%c0_38, %c0_39, %c0_40], %86 {strides = array<i32>} : memref<2x16x32xf32, #tpu.memory_space<vmem>>, vector<1x16x32xf32>,
    %87 = vector.broadcast %11 : vector<1x48xf32> to vector<16x48xf32>
    %88 = arith.addf %81, %87 : vector<16x48xf32>
    %c0_41 = arith.constant 0 : index
    %c0_42 = arith.constant 0 : index
    %c0_43 = arith.constant 0 : index
    %89 = vector.load %arg10[%c0_41, %c0_42, %c0_43] : memref<2x16x48xf32, #tpu.memory_space<vmem>>, vector<1x16x48xf32>
    %90 = vector.shape_cast %89 : vector<1x16x48xf32> to vector<16x48xf32>
    %91 = vector.shape_cast %88 : vector<16x48xf32> to vector<1x16x48xf32>
    tpu.vector_store %arg10[%c0_41, %c0_42, %c0_43], %91 {strides = array<i32>} : memref<2x16x48xf32, #tpu.memory_space<vmem>>, vector<1x16x48xf32>,
    %92 = vector.extract_strided_slice %5 {offsets = [16, 0], sizes = [16, 64], strides = [1, 1]} : vector<32x128xf32> to vector<16x64xf32>
    %93 = vector.extract_strided_slice %5 {offsets = [16, 64], sizes = [16, 64], strides = [1, 1]} : vector<32x128xf32> to vector<16x64xf32>
    %94 = vector.extract_strided_slice %7 {offsets = [16, 0], sizes = [16, 64], strides = [1, 1]} : vector<32x128xf32> to vector<16x64xf32>
    %95 = vector.extract_strided_slice %7 {offsets = [16, 64], sizes = [16, 64], strides = [1, 1]} : vector<32x128xf32> to vector<16x64xf32>
    %cst_44 = arith.constant 0.000000e+00 : f32
    %96 = vector.broadcast %cst_44 : f32 to vector<16x32xf32>
    %cst_45 = arith.constant 0.000000e+00 : f32
    %97 = vector.broadcast %cst_45 : f32 to vector<16x48xf32>
    %98 = vector.extract_strided_slice %92 {offsets = [0, 0], sizes = [16, 32], strides = [1, 1]} : vector<16x64xf32> to vector<16x32xf32>
    %99 = vector.extract_strided_slice %94 {offsets = [0, 0], sizes = [16, 32], strides = [1, 1]} : vector<16x64xf32> to vector<16x32xf32>
    %100 = vector.extract_strided_slice %93 {offsets = [0, 0], sizes = [16, 32], strides = [1, 1]} : vector<16x64xf32> to vector<16x32xf32>
    %101 = vector.extract_strided_slice %95 {offsets = [0, 0], sizes = [16, 32], strides = [1, 1]} : vector<16x64xf32> to vector<16x32xf32>
    %cst_46 = arith.constant dense<0.000000e+00> : vector<16x16xf32>
    %102 = tpu.matmul %98, %99, %cst_46 {dimension_numbers = #tpu.dot_dimension_numbers<[1], [1], [0], [0], [0, 0, 1, 0], [], []>} : vector<16x32xf32>, vector<16x32xf32>, vector<16x16xf32> -> vector<16x16xf32>
    %cst_47 = arith.constant 0.176776692 : f32
    %103 = vector.broadcast %cst_47 : f32 to vector<16x16xf32>
    %104 = arith.mulf %102, %103 : vector<16x16xf32>
    %105 = vector.shape_cast %104 : vector<16x16xf32> to vector<1x16x16xf32>
    %cst_48 = arith.constant dense<0xFF800000> : vector<1xf32>
    %106 = vector.multi_reduction <maximumf>, %105, %cst_48 [1, 2] : vector<1x16x16xf32> to vector<1xf32>
    %107 = vector.shape_cast %106 : vector<1xf32> to vector<1x1x1xf32>
    %108 = vector.extract %107[0, 0, 0] : f32 from vector<1x1x1xf32>
    %109 = vector.broadcast %108 : f32 to vector<16x16xf32>
    %110 = arith.subf %104, %109 : vector<16x16xf32>
    %111 = math.exp %110 : vector<16x16xf32>
    %cst_49 = arith.constant dense<0.000000e+00> : vector<16xf32>
    %112 = vector.multi_reduction <add>, %111, %cst_49 [1] : vector<16x16xf32> to vector<16xf32>
    %113 = vector.shape_cast %112 : vector<16xf32> to vector<16x1xf32>
    %114 = tpu.reciprocal %113 {approx = true} : vector<16x1xf32> -> vector<16x1xf32>
    %cst_50 = arith.constant dense<0.000000e+00> : vector<16xf32>
    %115 = vector.multi_reduction <add>, %111, %cst_50 [0] : vector<16x16xf32> to vector<16xf32>
    %116 = vector.shape_cast %115 : vector<16xf32> to vector<1x16xf32>
    %117 = tpu.reciprocal %116 {approx = true} : vector<1x16xf32> -> vector<1x16xf32>
    %118 = vector.broadcast %114 : vector<16x1xf32> to vector<16x16xf32>
    %119 = arith.mulf %111, %118 : vector<16x16xf32>
    %120 = vector.broadcast %117 : vector<1x16xf32> to vector<16x16xf32>
    %121 = arith.mulf %111, %120 : vector<16x16xf32>
    %cst_51 = arith.constant dense<0.000000e+00> : vector<16x32xf32>
    %122 = tpu.matmul %119, %101, %cst_51 {dimension_numbers = #tpu.dot_dimension_numbers<[1], [0], [0], [1], [0, 0, 1, 1], [], []>} : vector<16x16xf32>, vector<16x32xf32>, vector<16x32xf32> -> vector<16x32xf32>
    %cst_52 = arith.constant dense<0.000000e+00> : vector<16x32xf32>
    %123 = tpu.matmul %121, %100, %cst_52 {dimension_numbers = #tpu.dot_dimension_numbers<[0], [0], [1], [1], [0, 1, 1, 1], [], []>} : vector<16x16xf32>, vector<16x32xf32>, vector<16x32xf32> -> vector<16x32xf32>
    %124 = vector.extract_strided_slice %8 {offsets = [0, 0], sizes = [32, 32], strides = [1, 1]} : vector<64x32xf32> to vector<32x32xf32>
    %cst_53 = arith.constant dense<0.000000e+00> : vector<16x32xf32>
    %125 = tpu.matmul %122, %124, %cst_53 {dimension_numbers = #tpu.dot_dimension_numbers<[1], [0], [0], [1], [0, 0, 1, 1], [], []>} : vector<16x32xf32>, vector<32x32xf32>, vector<16x32xf32> -> vector<16x32xf32>
    %126 = arith.addf %96, %125 : vector<16x32xf32>
    %127 = vector.extract_strided_slice %9 {offsets = [0, 0], sizes = [32, 48], strides = [1, 1]} : vector<64x48xf32> to vector<32x48xf32>
    %cst_54 = arith.constant dense<0.000000e+00> : vector<16x48xf32>
    %128 = tpu.matmul %123, %127, %cst_54 {dimension_numbers = #tpu.dot_dimension_numbers<[1], [0], [0], [1], [0, 0, 1, 1], [], []>} : vector<16x32xf32>, vector<32x48xf32>, vector<16x48xf32> -> vector<16x48xf32>
    %129 = arith.addf %97, %128 : vector<16x48xf32>
    %130 = vector.extract_strided_slice %92 {offsets = [0, 32], sizes = [16, 32], strides = [1, 1]} : vector<16x64xf32> to vector<16x32xf32>
    %131 = vector.extract_strided_slice %94 {offsets = [0, 32], sizes = [16, 32], strides = [1, 1]} : vector<16x64xf32> to vector<16x32xf32>
    %132 = vector.extract_strided_slice %93 {offsets = [0, 32], sizes = [16, 32], strides = [1, 1]} : vector<16x64xf32> to vector<16x32xf32>
    %133 = vector.extract_strided_slice %95 {offsets = [0, 32], sizes = [16, 32], strides = [1, 1]} : vector<16x64xf32> to vector<16x32xf32>
    %cst_55 = arith.constant dense<0.000000e+00> : vector<16x16xf32>
    %134 = tpu.matmul %130, %131, %cst_55 {dimension_numbers = #tpu.dot_dimension_numbers<[1], [1], [0], [0], [0, 0, 1, 0], [], []>} : vector<16x32xf32>, vector<16x32xf32>, vector<16x16xf32> -> vector<16x16xf32>
    %cst_56 = arith.constant 0.176776692 : f32
    %135 = vector.broadcast %cst_56 : f32 to vector<16x16xf32>
    %136 = arith.mulf %134, %135 : vector<16x16xf32>
    %137 = vector.shape_cast %136 : vector<16x16xf32> to vector<1x16x16xf32>
    %cst_57 = arith.constant dense<0xFF800000> : vector<1xf32>
    %138 = vector.multi_reduction <maximumf>, %137, %cst_57 [1, 2] : vector<1x16x16xf32> to vector<1xf32>
    %139 = vector.shape_cast %138 : vector<1xf32> to vector<1x1x1xf32>
    %140 = vector.extract %139[0, 0, 0] : f32 from vector<1x1x1xf32>
    %141 = vector.broadcast %140 : f32 to vector<16x16xf32>
    %142 = arith.subf %136, %141 : vector<16x16xf32>
    %143 = math.exp %142 : vector<16x16xf32>
    %cst_58 = arith.constant dense<0.000000e+00> : vector<16xf32>
    %144 = vector.multi_reduction <add>, %143, %cst_58 [1] : vector<16x16xf32> to vector<16xf32>
    %145 = vector.shape_cast %144 : vector<16xf32> to vector<16x1xf32>
    %146 = tpu.reciprocal %145 {approx = true} : vector<16x1xf32> -> vector<16x1xf32>
    %cst_59 = arith.constant dense<0.000000e+00> : vector<16xf32>
    %147 = vector.multi_reduction <add>, %143, %cst_59 [0] : vector<16x16xf32> to vector<16xf32>
    %148 = vector.shape_cast %147 : vector<16xf32> to vector<1x16xf32>
    %149 = tpu.reciprocal %148 {approx = true} : vector<1x16xf32> -> vector<1x16xf32>
    %150 = vector.broadcast %146 : vector<16x1xf32> to vector<16x16xf32>
    %151 = arith.mulf %143, %150 : vector<16x16xf32>
    %152 = vector.broadcast %149 : vector<1x16xf32> to vector<16x16xf32>
    %153 = arith.mulf %143, %152 : vector<16x16xf32>
    %cst_60 = arith.constant dense<0.000000e+00> : vector<16x32xf32>
    %154 = tpu.matmul %151, %133, %cst_60 {dimension_numbers = #tpu.dot_dimension_numbers<[1], [0], [0], [1], [0, 0, 1, 1], [], []>} : vector<16x16xf32>, vector<16x32xf32>, vector<16x32xf32> -> vector<16x32xf32>
    %cst_61 = arith.constant dense<0.000000e+00> : vector<16x32xf32>
    %155 = tpu.matmul %153, %132, %cst_61 {dimension_numbers = #tpu.dot_dimension_numbers<[0], [0], [1], [1], [0, 1, 1, 1], [], []>} : vector<16x16xf32>, vector<16x32xf32>, vector<16x32xf32> -> vector<16x32xf32>
    %156 = vector.extract_strided_slice %8 {offsets = [32, 0], sizes = [32, 32], strides = [1, 1]} : vector<64x32xf32> to vector<32x32xf32>
    %cst_62 = arith.constant dense<0.000000e+00> : vector<16x32xf32>
    %157 = tpu.matmul %154, %156, %cst_62 {dimension_numbers = #tpu.dot_dimension_numbers<[1], [0], [0], [1], [0, 0, 1, 1], [], []>} : vector<16x32xf32>, vector<32x32xf32>, vector<16x32xf32> -> vector<16x32xf32>
    %158 = arith.addf %126, %157 : vector<16x32xf32>
    %159 = vector.extract_strided_slice %9 {offsets = [32, 0], sizes = [32, 48], strides = [1, 1]} : vector<64x48xf32> to vector<32x48xf32>
    %cst_63 = arith.constant dense<0.000000e+00> : vector<16x48xf32>
    %160 = tpu.matmul %155, %159, %cst_63 {dimension_numbers = #tpu.dot_dimension_numbers<[1], [0], [0], [1], [0, 0, 1, 1], [], []>} : vector<16x32xf32>, vector<32x48xf32>, vector<16x48xf32> -> vector<16x48xf32>
    %161 = arith.addf %129, %160 : vector<16x48xf32>
    %162 = vector.broadcast %10 : vector<1x32xf32> to vector<16x32xf32>
    %163 = arith.addf %158, %162 : vector<16x32xf32>
    %c1 = arith.constant 1 : index
    %c0_64 = arith.constant 0 : index
    %c0_65 = arith.constant 0 : index
    %164 = vector.load %arg9[%c1, %c0_64, %c0_65] : memref<2x16x32xf32, #tpu.memory_space<vmem>>, vector<1x16x32xf32>
    %165 = vector.shape_cast %164 : vector<1x16x32xf32> to vector<16x32xf32>
    %166 = vector.shape_cast %163 : vector<16x32xf32> to vector<1x16x32xf32>
    tpu.vector_store %arg9[%c1, %c0_64, %c0_65], %166 {strides = array<i32>} : memref<2x16x32xf32, #tpu.memory_space<vmem>>, vector<1x16x32xf32>,
    %167 = vector.broadcast %11 : vector<1x48xf32> to vector<16x48xf32>
    %168 = arith.addf %161, %167 : vector<16x48xf32>
    %c1_66 = arith.constant 1 : index
    %c0_67 = arith.constant 0 : index
    %c0_68 = arith.constant 0 : index
    %169 = vector.load %arg10[%c1_66, %c0_67, %c0_68] : memref<2x16x48xf32, #tpu.memory_space<vmem>>, vector<1x16x48xf32>
    %170 = vector.shape_cast %169 : vector<1x16x48xf32> to vector<16x48xf32>
    %171 = vector.shape_cast %168 : vector<16x48xf32> to vector<1x16x48xf32>
    tpu.vector_store %arg10[%c1_66, %c0_67, %c0_68], %171 {strides = array<i32>} : memref<2x16x48xf32, #tpu.memory_space<vmem>>, vector<1x16x48xf32>,
    return
  }
  func.func @transform_0(%arg0: i32) -> (i32, i32, i32) {
    %c0_i32 = arith.constant 0 : i32
    %c0_i32_0 = arith.constant 0 : i32
    %c0_i32_1 = arith.constant 0 : i32
    %c0_i32_2 = arith.constant 0 : i32
    return %c0_i32, %c0_i32_0, %c0_i32_1 : i32, i32, i32
  }
  func.func @transform_1(%arg0: i32) -> (i32, i32, i32) {
    %c0_i32 = arith.constant 0 : i32
    %c0_i32_0 = arith.constant 0 : i32
    %c0_i32_1 = arith.constant 0 : i32
    %c0_i32_2 = arith.constant 0 : i32
    return %c0_i32, %c0_i32_0, %c0_i32_1 : i32, i32, i32
  }
  func.func @transform_2(%arg0: i32) -> (i32, i32) {
    %c0_i32 = arith.constant 0 : i32
    %c0_i32_0 = arith.constant 0 : i32
    %c0_i32_1 = arith.constant 0 : i32
    return %c0_i32, %c0_i32_0 : i32, i32
  }
  func.func @transform_3(%arg0: i32) -> (i32, i32) {
    %c0_i32 = arith.constant 0 : i32
    %c0_i32_0 = arith.constant 0 : i32
    %c0_i32_1 = arith.constant 0 : i32
    return %c0_i32, %c0_i32_0 : i32, i32
  }
  func.func @transform_4(%arg0: i32) -> (i32, i32) {
    %c0_i32 = arith.constant 0 : i32
    %c0_i32_0 = arith.constant 0 : i32
    %c0_i32_1 = arith.constant 0 : i32
    return %c0_i32, %c0_i32_0 : i32, i32
  }
  func.func @transform_5(%arg0: i32) -> (i32, i32) {
    %c0_i32 = arith.constant 0 : i32
    %c0_i32_0 = arith.constant 0 : i32
    %c0_i32_1 = arith.constant 0 : i32
    return %c0_i32, %c0_i32_0 : i32, i32
  }
  func.func @transform_6(%arg0: i32) -> (i32, i32) {
    %c0_i32 = arith.constant 0 : i32
    %c0_i32_0 = arith.constant 0 : i32
    %c0_i32_1 = arith.constant 0 : i32
    return %c0_i32, %c0_i32_0 : i32, i32
  }
  func.func @transform_7(%arg0: i32) -> (i32, i32) {
    %c0_i32 = arith.constant 0 : i32
    %c0_i32_0 = arith.constant 0 : i32
    %c0_i32_1 = arith.constant 0 : i32
    return %c0_i32, %c0_i32_0 : i32, i32
  }
  func.func @transform_8(%arg0: i32) -> (i32, i32, i32) {
    %c0_i32 = arith.constant 0 : i32
    %c0_i32_0 = arith.constant 0 : i32
    %c0_i32_1 = arith.constant 0 : i32
    %c0_i32_2 = arith.constant 0 : i32
    return %c0_i32, %c0_i32_0, %c0_i32_1 : i32, i32, i32
  }
  func.func @transform_9(%arg0: i32) -> (i32, i32, i32) {
    %c0_i32 = arith.constant 0 : i32
    %c0_i32_0 = arith.constant 0 : i32
    %c0_i32_1 = arith.constant 0 : i32
    %c0_i32_2 = arith.constant 0 : i32
    return %c0_i32, %c0_i32_0, %c0_i32_1 : i32, i32, i32
  }
}

</mosaic_0001>

<llo_original>
// kernel: tpu_custom_call.1
$region0: #{tpu_custom_call.1}
  #allocation0 [shape = 'u32[]', space=smem, size = 0x4, offset = 0x4, fixed_abs, tag = 'smem constant byte address 0x4 - core index']
  #allocation1 [shape = 'u32[144,128]{1,0:T(1,128)}', space=vmem, size = 0x12000, scoped, tag = 'internal scratch']
  %s0 = inlined_call_operand.vmem [shape: f32[2,16,32], index: 0, kind: input, shape index: {}]
  %s1 = inlined_call_operand.vmem [shape: f32[2,16,48], index: 1, kind: input, shape index: {}]
  %s2 = inlined_call_operand.vmem [shape: f32[32,128], index: 2, kind: input, shape index: {}]
  %s3 = inlined_call_operand.vmem [shape: f32[48,128], index: 3, kind: input, shape index: {}]
  %s4 = inlined_call_operand.vmem [shape: f32[64,32], index: 4, kind: input, shape index: {}]
  %s5 = inlined_call_operand.vmem [shape: f32[1,32], index: 5, kind: input, shape index: {}]
  %s6 = inlined_call_operand.vmem [shape: f32[64,48], index: 6, kind: input, shape index: {}]
  %s7 = inlined_call_operand.vmem [shape: f32[1,48], index: 7, kind: input, shape index: {}]
  %s8 = inlined_call_operand.hbm [shape: f32[2,16,32], index: 8, kind: output, shape index: {0}]
  %s9 = inlined_call_operand.hbm [shape: f32[2,16,48], index: 9, kind: output, shape index: {1}]
  %10 = xla_tuple %s8, %s9
  %s11 = sld [smem:[#allocation0]]
  $region50: #{tpu_custom_call.1} parent=0
    _
  %s13 = ssub.s32 1, %s11
  %s14 = scalar_select 0, %s13, %s11
  $region1: #{tpu_custom_call.1} parent=0
    #allocation2 [shape = 'u8[16384]{0}', space=vmem, size = 0x4000, scoped, tag = 'output window, operand 0, single buffered']
    #allocation3 [shape = 's32[1]{0}', space=sflag, size = 0x4, scoped, tag = 'scoped memory for tpu_custom_call.1']
    #allocation4 [shape = 'u8[16384]{0}', space=vmem, size = 0x4000, scoped, tag = 'output window, operand 1, single buffered']
    #allocation5 [shape = 's32[1]{0}', space=sflag, size = 0x4, scoped, tag = 'scoped memory for tpu_custom_call.1']
    %15 = vsyncpa [#allocation3], 0
    %16 = vsyncpa [#allocation5], 0
    // Predicated region
    $region2: #{tpu_custom_call.1} parent=1 // pred_check
      _
    $region3: #{tpu_custom_call.1} parent=1 // pred_check_branch
      %18 = sbr.rel (0) target = $region5
    $region4: #{tpu_custom_call.1} parent=1 // pred_region
      _
    $region5: #{tpu_custom_call.1} parent=1 // pred_fallthru
      _
    // Predicated region
    $region6: #{tpu_custom_call.1} parent=1 // pred_check
      _
    $region7: #{tpu_custom_call.1} parent=1 // pred_check_branch
      %20 = sbr.rel (0) target = $region9
    $region8: #{tpu_custom_call.1} parent=1 // pred_region
      _
    $region9: #{tpu_custom_call.1} parent=1 // pred_fallthru
      _
    // Predicated region
    $region10: #{tpu_custom_call.1} parent=1 // pred_check
      _
    $region11: #{tpu_custom_call.1} parent=1 // pred_check_branch
      %22 = sbr.rel (0) target = $region13
    $region12: #{tpu_custom_call.1} parent=1 // pred_region
      _
    $region13: #{tpu_custom_call.1} parent=1 // pred_fallthru
      _
    // Predicated region
    $region14: #{tpu_custom_call.1} parent=1 // pred_check
      _
    $region15: #{tpu_custom_call.1} parent=1 // pred_check_branch
      %24 = sbr.rel (0) target = $region17
    $region16: #{tpu_custom_call.1} parent=1 // pred_region
      _
    $region17: #{tpu_custom_call.1} parent=1 // pred_fallthru
      _
    // Predicated region
    $region18: #{tpu_custom_call.1} parent=1 // pred_check
      _
    $region19: #{tpu_custom_call.1} parent=1 // pred_check_branch
      %26 = sbr.rel (0) target = $region21
    $region20: #{tpu_custom_call.1} parent=1 // pred_region
      _
    $region21: #{tpu_custom_call.1} parent=1 // pred_fallthru
      _
    // Predicated region
    $region22: #{tpu_custom_call.1} parent=1 // pred_check
      _
    $region23: #{tpu_custom_call.1} parent=1 // pred_check_branch
      %28 = sbr.rel (0) target = $region25
    $region24: #{tpu_custom_call.1} parent=1 // pred_region
      _
    $region25: #{tpu_custom_call.1} parent=1 // pred_fallthru
      _
    // Predicated region
    $region26: #{tpu_custom_call.1} parent=1 // pred_check
      _
    $region27: #{tpu_custom_call.1} parent=1 // pred_check_branch
      %30 = sbr.rel (0) target = $region29
    $region28: #{tpu_custom_call.1} parent=1 // pred_region
      _
    $region29: #{tpu_custom_call.1} parent=1 // pred_fallthru
      _
    // Predicated region
    $region30: #{tpu_custom_call.1} parent=1 // pred_check
      _
    $region31: #{tpu_custom_call.1} parent=1 // pred_check_branch
      %32 = sbr.rel (0) target = $region33
    $region32: #{tpu_custom_call.1} parent=1 // pred_region
      _
    $region33: #{tpu_custom_call.1} parent=1 // pred_fallthru
      _
    %v33 = vld [vmem:[%s0] sm:$0xff]
    %v34 = vld [vmem:[%s0 + $0x8] sm:$0xff]
    %v35 = vld [vmem:[%s0 + $0x10] sm:$0xff]
    %v36 = vld [vmem:[%s0 + $0x18] sm:$0xff]
    %v37 = vld [vmem:[%s1] sm:$0xff]
    %v38 = vld [vmem:[%s1 + $0x8] sm:$0xff]
    %v39 = vld [vmem:[%s1 + $0x10] sm:$0xff]
    %v40 = vld [vmem:[%s1 + $0x18] sm:$0xff]
    %v41 = vld [vmem:[%s2] sm:$0xff]
    %v42 = vld [vmem:[%s2 + $0x8] sm:$0xff]
    %v43 = vld [vmem:[%s2 + $0x10] sm:$0xff]
    %v44 = vld [vmem:[%s2 + $0x18] sm:$0xff]
    %vm45 = vcmask 261120
    %v47 = vsel %vm45, %v33, 0
    %v50 = vsel %vm45, %v34, 0
    %v53 = vsel %vm45, %v35, 0
    %v56 = vsel %vm45, %v36, 0
    %58 = vmatprep.subr.mxu0 0.0
    %59 = vmatpush1.msra.mxu0 %v41
    %60 = vmatprep.subr.mxu0 0.0
    %61 = vmatpush1.msra.mxu0 %v42
    %62 = vmatprep.subr.mxu0 0.0
    %63 = vmatpush1.msra.mxu0 %v43
    %64 = vmatprep.subr.mxu0 0.0
    %65 = vmatpush1.msra.mxu0 %v44
    %66 = vmatprep.subr.mxu0 0.0
    %67 = vmatpush1.msra.mxu0 0.0
    %68 = vmatprep.subr.mxu0 0.0
    %69 = vmatpush1.msra.mxu0 0.0
    %70 = vmatprep.subr.mxu0 0.0
    %71 = vmatpush1.msra.mxu0 0.0
    %72 = vmatprep.subr.mxu0 0.0
    %73 = vmatpush1.msra.mxu0 0.0
    %74 = vmatprep.subr.mxu0 0.0
    %75 = vmatpush1.msra.mxu0 0.0
    %76 = vmatprep.subr.mxu0 0.0
    %77 = vmatpush1.msra.mxu0 0.0
    %78 = vmatprep.subr.mxu0 0.0
    %79 = vmatpush1.msra.mxu0 0.0
    %80 = vmatprep.subr.mxu0 0.0
    %81 = vmatpush1.msra.mxu0 0.0
    %82 = vmatprep.subr.mxu0 0.0
    %83 = vmatpush1.msra.mxu0 0.0
    %84 = vmatprep.subr.mxu0 0.0
    %85 = vmatpush1.msra.mxu0 0.0
    %86 = vmatprep.subr.mxu0 0.0
    %87 = vmatpush1.msra.mxu0 0.0
    %88 = vmatprep.subr.mxu0 0.0
    %89 = vmatpush1.msra.mxu0 0.0
    %90 = vmatprep.subr.mxu0 0.0
    %91 = vmatpush1.msra.mxu0 0.0
    %92 = vmatprep.subr.mxu0 0.0
    %93 = vmatpush1.msra.mxu0 0.0
    %94 = vmatprep.subr.mxu0 0.0
    %95 = vmatpush1.msra.mxu0 0.0
    %96 = vmatprep.subr.mxu0 0.0
    %97 = vmatpush1.msra.mxu0 0.0
    %98 = vmatprep.subr.mxu0 0.0
    %99 = vmatpush1.msra.mxu0 0.0
    %100 = vmatprep.subr.mxu0 0.0
    %101 = vmatpush1.msra.mxu0 0.0
    %102 = vmatprep.subr.mxu0 0.0
    %103 = vmatpush1.msra.mxu0 0.0
    %104 = vmatprep.subr.mxu0 0.0
    %105 = vmatpush1.msra.mxu0 0.0
    %106 = vmatprep.subr.mxu0 0.0
    %107 = vmatpush1.msra.mxu0 0.0
    %108 = vmatprep.subr.mxu0 0.0
    %109 = vmatpush1.msra.mxu0 0.0
    %110 = vmatprep.subr.mxu0 0.0
    %111 = vmatpush1.msra.mxu0 0.0
    %112 = vmatprep.subr.mxu0 0.0
    %113 = vmatpush1.msra.mxu0 0.0
    %114 = vmatprep.subr.mxu0 0.0
    %115 = vmatpush1.msra.mxu0 0.0
    %116 = vmatprep.subr.mxu0 0.0
    %117 = vmatpush1.msra.mxu0 0.0
    %118 = vmatprep.subr.mxu0 0.0
    %119 = vmatpush1.msra.mxu0 0.0
    %120 = vmatprep.subr.mxu0 0.0
    %121 = vmatpush1.msra.mxu0 0.0
    %122 = vmatprep.mubr.f32.mxu0 0.0
    %123 = vmatmul.mubr.f32.gmra.mrb[0].mxu0 %v47
    %v124 = vpop.f32.mrb[0].mxu0
    %v125 = vadd.f32 0.0, %v124
    %v126 = vpop.f32.mrb[0].mxu0
    %127 = vmatprep.mubr.f32.mxu0 0.0
    %128 = vmatmul.mubr.f32.gmra.mrb[0].mxu0 %v50
    %v129 = vpop.f32.mrb[0].mxu0
    %v130 = vadd.f32 0.0, %v129
    %v131 = vpop.f32.mrb[0].mxu0
    %132 = vmatprep.mubr.f32.mxu0 0.0
    %133 = vmatmul.mubr.f32.gmra.mrb[0].mxu0 %v53
    %v134 = vpop.f32.mrb[0].mxu0
    %v135 = vadd.f32 0.0, %v134
    %v136 = vpop.f32.mrb[0].mxu0
    %137 = vmatprep.mubr.f32.mxu0 0.0
    %138 = vmatmul.mubr.f32.gmra.mrb[0].mxu0 %v56
    %v139 = vpop.f32.mrb[0].mxu0
    %v140 = vadd.f32 0.0, %v139
    %v141 = vpop.f32.mrb[0].mxu0
    %142 = vdwg.mxu0
    %v143 = vld [vmem:[%s3] sm:$0xff]
    %v144 = vld [vmem:[%s3 + $0x8] sm:$0xff]
    %v145 = vld [vmem:[%s3 + $0x10] sm:$0xff]
    %v146 = vld [vmem:[%s3 + $0x18] sm:$0xff]
    %v147 = vld [vmem:[%s3 + $0x20] sm:$0xff]
    %v148 = vld [vmem:[%s3 + $0x28] sm:$0xff]
    %vm149 = vcmask 392192
    %v151 = vsel %vm149, %v37, 0
    %v154 = vsel %vm149, %v38, 0
    %v157 = vsel %vm149, %v39, 0
    %v160 = vsel %vm149, %v40, 0
    %162 = vmatprep.subr.mxu0 0.0
    %163 = vmatpush1.msra.mxu0 %v143
    %164 = vmatprep.subr.mxu0 0.0
    %165 = vmatpush1.msra.mxu0 %v144
    %166 = vmatprep.subr.mxu0 0.0
    %167 = vmatpush1.msra.mxu0 %v145
    %168 = vmatprep.subr.mxu0 0.0
    %169 = vmatpush1.msra.mxu0 %v146
    %170 = vmatprep.subr.mxu0 0.0
    %171 = vmatpush1.msra.mxu0 %v147
    %172 = vmatprep.subr.mxu0 0.0
    %173 = vmatpush1.msra.mxu0 %v148
    %174 = vmatprep.subr.mxu0 0.0
    %175 = vmatpush1.msra.mxu0 0.0
    %176 = vmatprep.subr.mxu0 0.0
    %177 = vmatpush1.msra.mxu0 0.0
    %178 = vmatprep.subr.mxu0 0.0
    %179 = vmatpush1.msra.mxu0 0.0
    %180 = vmatprep.subr.mxu0 0.0
    %181 = vmatpush1.msra.mxu0 0.0
    %182 = vmatprep.subr.mxu0 0.0
    %183 = vmatpush1.msra.mxu0 0.0
    %184 = vmatprep.subr.mxu0 0.0
    %185 = vmatpush1.msra.mxu0 0.0
    %186 = vmatprep.subr.mxu0 0.0
    %187 = vmatpush1.msra.mxu0 0.0
    %188 = vmatprep.subr.mxu0 0.0
    %189 = vmatpush1.msra.mxu0 0.0
    %190 = vmatprep.subr.mxu0 0.0
    %191 = vmatpush1.msra.mxu0 0.0
    %192 = vmatprep.subr.mxu0 0.0
    %193 = vmatpush1.msra.mxu0 0.0
    %194 = vmatprep.subr.mxu0 0.0
    %195 = vmatpush1.msra.mxu0 0.0
    %196 = vmatprep.subr.mxu0 0.0
    %197 = vmatpush1.msra.mxu0 0.0
    %198 = vmatprep.subr.mxu0 0.0
    %199 = vmatpush1.msra.mxu0 0.0
    %200 = vmatprep.subr.mxu0 0.0
    %201 = vmatpush1.msra.mxu0 0.0
    %202 = vmatprep.subr.mxu0 0.0
    %203 = vmatpush1.msra.mxu0 0.0
    %204 = vmatprep.subr.mxu0 0.0
    %205 = vmatpush1.msra.mxu0 0.0
    %206 = vmatprep.subr.mxu0 0.0
    %207 = vmatpush1.msra.mxu0 0.0
    %208 = vmatprep.subr.mxu0 0.0
    %209 = vmatpush1.msra.mxu0 0.0
    %210 = vmatprep.subr.mxu0 0.0
    %211 = vmatpush1.msra.mxu0 0.0
    %212 = vmatprep.subr.mxu0 0.0
    %213 = vmatpush1.msra.mxu0 0.0
    %214 = vmatprep.subr.mxu0 0.0
    %215 = vmatpush1.msra.mxu0 0.0
    %216 = vmatprep.subr.mxu0 0.0
    %217 = vmatpush1.msra.mxu0 0.0
    %218 = vmatprep.subr.mxu0 0.0
    %219 = vmatpush1.msra.mxu0 0.0
    %220 = vmatprep.subr.mxu0 0.0
    %221 = vmatpush1.msra.mxu0 0.0
    %222 = vmatprep.subr.mxu0 0.0
    %223 = vmatpush1.msra.mxu0 0.0
    %224 = vmatprep.subr.mxu0 0.0
    %225 = vmatpush1.msra.mxu0 0.0
    %226 = vmatprep.mubr.f32.mxu0 0.0
    %227 = vmatmul.mubr.f32.gmra.mrb[0].mxu0 %v151
    %v228 = vpop.f32.mrb[0].mxu0
    %v229 = vadd.f32 0.0, %v228
    %v230 = vpop.f32.mrb[0].mxu0
    %231 = vmatprep.mubr.f32.mxu0 0.0
    %232 = vmatmul.mubr.f32.gmra.mrb[0].mxu0 %v154
    %v233 = vpop.f32.mrb[0].mxu0
    %v234 = vadd.f32 0.0, %v233
    %v235 = vpop.f32.mrb[0].mxu0
    %236 = vmatprep.mubr.f32.mxu0 0.0
    %237 = vmatmul.mubr.f32.gmra.mrb[0].mxu0 %v157
    %v238 = vpop.f32.mrb[0].mxu0
    %v239 = vadd.f32 0.0, %v238
    %v240 = vpop.f32.mrb[0].mxu0
    %241 = vmatprep.mubr.f32.mxu0 0.0
    %242 = vmatmul.mubr.f32.gmra.mrb[0].mxu0 %v160
    %v243 = vpop.f32.mrb[0].mxu0
    %v244 = vadd.f32 0.0, %v243
    %v245 = vpop.f32.mrb[0].mxu0
    %246 = vdwg.mxu0
    %v247 = vld [vmem:[%s4] sm:$0xff]
    %v248 = vld [vmem:[%s4 + $0x8] sm:$0xff]
    %v249 = vld [vmem:[%s4 + $0x10] sm:$0xff]
    %v250 = vld [vmem:[%s4 + $0x18] sm:$0xff]
    %v251 = vld [vmem:[%s4 + $0x20] sm:$0xff]
    %v252 = vld [vmem:[%s4 + $0x28] sm:$0xff]
    %v253 = vld [vmem:[%s4 + $0x30] sm:$0xff]
    %v254 = vld [vmem:[%s4 + $0x38] sm:$0xff]
    %v255 = vld [vmem:[%s6] sm:$0xff]
    %v256 = vld [vmem:[%s6 + $0x8] sm:$0xff]
    %v257 = vld [vmem:[%s6 + $0x10] sm:$0xff]
    %v258 = vld [vmem:[%s6 + $0x18] sm:$0xff]
    %v259 = vld [vmem:[%s6 + $0x20] sm:$0xff]
    %v260 = vld [vmem:[%s6 + $0x28] sm:$0xff]
    %v261 = vld [vmem:[%s6 + $0x30] sm:$0xff]
    %v262 = vld [vmem:[%s6 + $0x38] sm:$0xff]
    %v263 = vld [vmem:[%s5] sm:$0x1]
    %v264 = vld [vmem:[%s7] sm:$0x1]
    %v266 = vsel %vm45, %v125, 0
    %v269 = vsel %vm45, %v130, 0
    %v272 = vsel %vm45, %v229, 0
    %v275 = vsel %vm45, %v234, 0
    %277 = vmatprep.subr.mxu0 0.0
    %278 = vmatpush1.xpose.msra.mxu0 %v272
    %279 = vmatprep.subr.mxu0 0.0
    %280 = vmatpush1.xpose.msra.mxu0 %v275
    %281 = vmatprep.subr.mxu0 0.0
    %282 = vmatpush1.xpose.msra.mxu0 0.0
    %283 = vmatprep.subr.mxu0 0.0
    %284 = vmatpush1.xpose.msra.mxu0 0.0
    %285 = vmatprep.subr.mxu0 0.0
    %286 = vmatpush1.xpose.msra.mxu0 0.0
    %287 = vmatprep.subr.mxu0 0.0
    %288 = vmatpush1.xpose.msra.mxu0 0.0
    %289 = vmatprep.subr.mxu0 0.0
    %290 = vmatpush1.xpose.msra.mxu0 0.0
    %291 = vmatprep.subr.mxu0 0.0
    %292 = vmatpush1.xpose.msra.mxu0 0.0
    %293 = vmatprep.subr.mxu0 0.0
    %294 = vmatpush1.xpose.msra.mxu0 0.0
    %295 = vmatprep.subr.mxu0 0.0
    %296 = vmatpush1.xpose.msra.mxu0 0.0
    %297 = vmatprep.subr.mxu0 0.0
    %298 = vmatpush1.xpose.msra.mxu0 0.0
    %299 = vmatprep.subr.mxu0 0.0
    %300 = vmatpush1.xpose.msra.mxu0 0.0
    %301 = vmatprep.subr.mxu0 0.0
    %302 = vmatpush1.xpose.msra.mxu0 0.0
    %303 = vmatprep.subr.mxu0 0.0
    %304 = vmatpush1.xpose.msra.mxu0 0.0
    %305 = vmatprep.subr.mxu0 0.0
    %306 = vmatpush1.xpose.msra.mxu0 0.0
    %307 = vmatprep.subr.mxu0 0.0
    %308 = vmatpush1.xpose.msra.mxu0 0.0
    %309 = vmatprep.subr.mxu0 0.0
    %310 = vmatpush1.xpose.msra.mxu0 0.0
    %311 = vmatprep.subr.mxu0 0.0
    %312 = vmatpush1.xpose.msra.mxu0 0.0
    %313 = vmatprep.subr.mxu0 0.0
    %314 = vmatpush1.xpose.msra.mxu0 0.0
    %315 = vmatprep.subr.mxu0 0.0
    %316 = vmatpush1.xpose.msra.mxu0 0.0
    %317 = vmatprep.subr.mxu0 0.0
    %318 = vmatpush1.xpose.msra.mxu0 0.0
    %319 = vmatprep.subr.mxu0 0.0
    %320 = vmatpush1.xpose.msra.mxu0 0.0
    %321 = vmatprep.subr.mxu0 0.0
    %322 = vmatpush1.xpose.msra.mxu0 0.0
    %323 = vmatprep.subr.mxu0 0.0
    %324 = vmatpush1.xpose.msra.mxu0 0.0
    %325 = vmatprep.subr.mxu0 0.0
    %326 = vmatpush1.xpose.msra.mxu0 0.0
    %327 = vmatprep.subr.mxu0 0.0
    %328 = vmatpush1.xpose.msra.mxu0 0.0
    %329 = vmatprep.subr.mxu0 0.0
    %330 = vmatpush1.xpose.msra.mxu0 0.0
    %331 = vmatprep.subr.mxu0 0.0
    %332 = vmatpush1.xpose.msra.mxu0 0.0
    %333 = vmatprep.subr.mxu0 0.0
    %334 = vmatpush1.xpose.msra.mxu0 0.0
    %335 = vmatprep.subr.mxu0 0.0
    %336 = vmatpush1.xpose.msra.mxu0 0.0
    %337 = vmatprep.subr.mxu0 0.0
    %338 = vmatpush1.xpose.msra.mxu0 0.0
    %339 = vmatprep.subr.mxu0 0.0
    %340 = vmatpush1.xpose.msra.mxu0 0.0
    %341 = vmatprep.mubr.f32.mxu0 0.0
    %342 = vmatmul.mubr.f32.gmra.mrb[0].mxu0 %v266
    %v343 = vpop.f32.mrb[0].mxu0
    %v344 = vadd.f32 0.0, %v343
    %v345 = vpop.f32.mrb[0].mxu0
    %346 = vmatprep.mubr.f32.mxu0 0.0
    %347 = vmatmul.mubr.f32.gmra.mrb[0].mxu0 %v269
    %v348 = vpop.f32.mrb[0].mxu0
    %v349 = vadd.f32 0.0, %v348
    %v350 = vpop.f32.mrb[0].mxu0
    %351 = vdwg.mxu0
    %v352 = vmul.f32 %v344, 0.17677669
    %v353 = vmul.f32 %v349, 0.17677669
    %vm354 = vcmask 130048
    %v355 = vsel %vm354, %v352, -inf
    %v356 = vsel %vm354, %v353, -inf
    %v357 = vmax.f32 %v355, %v356
    %358 = vmax.xlane.f32.xlu0 %v357
    %v359 = vpop.xlane.xlu0 %358
    %v360 = vrot.slane %v359, 4
    %v361 = vmax.f32 %v359, %v360
    %v362 = vrot.slane %v361, 2
    %v363 = vmax.f32 %v361, %v362
    %v364 = vrot.slane %v363, 1
    %v365 = vmax.f32 %v363, %v364
    %s366 = vtos %v365
    %v367 = vstv %s366
    %v368 = vsub.f32 %v352, %v367
    %v369 = vsub.f32 %v353, %v367
    %v370 = vmul.f32 %v368, 1.442695
    %v371 = vpow.pop %v370
    %v372 = vmul.f32 %v369, 1.442695
    %v373 = vpow.pop %v372
    %v374 = vsel %vm354, %v371, 0.0
    %375 = vadd.xlane.f32.xlu0 %v374
    %v376 = vpop.xlane.xlu0 %375
    %v377 = vsel %vm354, %v373, 0.0
    %378 = vadd.xlane.f32.xlu0 %v377
    %v379 = vpop.xlane.xlu0 %378
    %v380 = vrcp.pop %v376
    %v381 = vrcp.pop %v379
    %v382 = vadd.f32 %v374, %v377
    %v383 = vrot.slane %v382, 4
    %v384 = vadd.f32 %v382, %v383
    %v385 = vrot.slane %v384, 2
    %v386 = vadd.f32 %v384, %v385
    %v387 = vrot.slane %v386, 1
    %v388 = vadd.f32 %v386, %v387
    %v389 = vrcp.pop %v388
    %v390 = vmul.f32 %v371, %v380
    %v391 = vmul.f32 %v373, %v381
    %v392 = vmul.f32 %v371, %v389
    %v393 = vmul.f32 %v373, %v389
    %394 = vrot.lane.b32.xlu0 %v229, 64
    %v395 = vpop.permute.xlu0 %394
    %396 = vrot.lane.b32.xlu0 %v234, 64
    %v397 = vpop.permute.xlu0 %396
    %v401 = vsel %vm354, %v390, 0
    %v404 = vsel %vm354, %v391, 0
    %406 = vmatprep.subr.mxu0 0.0
    %407 = vmatpush1.msra.mxu0 %v395
    %408 = vmatprep.subr.mxu0 0.0
    %409 = vmatpush1.msra.mxu0 %v397
    %410 = vmatprep.subr.mxu0 0.0
    %411 = vmatpush1.msra.mxu0 0.0
    %412 = vmatprep.subr.mxu0 0.0
    %413 = vmatpush1.msra.mxu0 0.0
    %414 = vmatprep.subr.mxu0 0.0
    %415 = vmatpush1.msra.mxu0 0.0
    %416 = vmatprep.subr.mxu0 0.0
    %417 = vmatpush1.msra.mxu0 0.0
    %418 = vmatprep.subr.mxu0 0.0
    %419 = vmatpush1.msra.mxu0 0.0
    %420 = vmatprep.subr.mxu0 0.0
    %421 = vmatpush1.msra.mxu0 0.0
    %422 = vmatprep.subr.mxu0 0.0
    %423 = vmatpush1.msra.mxu0 0.0
    %424 = vmatprep.subr.mxu0 0.0
    %425 = vmatpush1.msra.mxu0 0.0
    %426 = vmatprep.subr.mxu0 0.0
    %427 = vmatpush1.msra.mxu0 0.0
    %428 = vmatprep.subr.mxu0 0.0
    %429 = vmatpush1.msra.mxu0 0.0
    %430 = vmatprep.subr.mxu0 0.0
    %431 = vmatpush1.msra.mxu0 0.0
    %432 = vmatprep.subr.mxu0 0.0
    %433 = vmatpush1.msra.mxu0 0.0
    %434 = vmatprep.subr.mxu0 0.0
    %435 = vmatpush1.msra.mxu0 0.0
    %436 = vmatprep.subr.mxu0 0.0
    %437 = vmatpush1.msra.mxu0 0.0
    %438 = vmatprep.subr.mxu0 0.0
    %439 = vmatpush1.msra.mxu0 0.0
    %440 = vmatprep.subr.mxu0 0.0
    %441 = vmatpush1.msra.mxu0 0.0
    %442 = vmatprep.subr.mxu0 0.0
    %443 = vmatpush1.msra.mxu0 0.0
    %444 = vmatprep.subr.mxu0 0.0
    %445 = vmatpush1.msra.mxu0 0.0
    %446 = vmatprep.subr.mxu0 0.0
    %447 = vmatpush1.msra.mxu0 0.0
    %448 = vmatprep.subr.mxu0 0.0
    %449 = vmatpush1.msra.mxu0 0.0
    %450 = vmatprep.subr.mxu0 0.0
    %451 = vmatpush1.msra.mxu0 0.0
    %452 = vmatprep.subr.mxu0 0.0
    %453 = vmatpush1.msra.mxu0 0.0
    %454 = vmatprep.subr.mxu0 0.0
    %455 = vmatpush1.msra.mxu0 0.0
    %456 = vmatprep.subr.mxu0 0.0
    %457 = vmatpush1.msra.mxu0 0.0
    %458 = vmatprep.subr.mxu0 0.0
    %459 = vmatpush1.msra.mxu0 0.0
    %460 = vmatprep.subr.mxu0 0.0
    %461 = vmatpush1.msra.mxu0 0.0
    %462 = vmatprep.subr.mxu0 0.0
    %463 = vmatpush1.msra.mxu0 0.0
    %464 = vmatprep.subr.mxu0 0.0
    %465 = vmatpush1.msra.mxu0 0.0
    %466 = vmatprep.subr.mxu0 0.0
    %467 = vmatpush1.msra.mxu0 0.0
    %468 = vmatprep.subr.mxu0 0.0
    %469 = vmatpush1.msra.mxu0 0.0
    %470 = vmatprep.mubr.f32.mxu0 0.0
    %471 = vmatmul.mubr.f32.gmra.mrb[0].mxu0 %v401
    %v472 = vpop.f32.mrb[0].mxu0
    %v473 = vadd.f32 0.0, %v472
    %v474 = vpop.f32.mrb[0].mxu0
    %475 = vmatprep.mubr.f32.mxu0 0.0
    %476 = vmatmul.mubr.f32.gmra.mrb[0].mxu0 %v404
    %v477 = vpop.f32.mrb[0].mxu0
    %v478 = vadd.f32 0.0, %v477
    %v479 = vpop.f32.mrb[0].mxu0
    %480 = vdwg.mxu0
    %481 = vxpose.xlu0.b32.start [1/16] %v392, 128
    %482 = vxpose.xlu0.b32.cont [2/16] %v393, 128
    %483 = vxpose.xlu0.b32.cont [3/16] 0.0, 128
    %484 = vxpose.xlu0.b32.cont [4/16] 0.0, 128
    %485 = vxpose.xlu0.b32.cont [5/16] 0.0, 128
    %486 = vxpose.xlu0.b32.cont [6/16] 0.0, 128
    %487 = vxpose.xlu0.b32.cont [7/16] 0.0, 128
    %488 = vxpose.xlu0.b32.cont [8/16] 0.0, 128
    %489 = vxpose.xlu0.b32.cont [9/16] 0.0, 128
    %490 = vxpose.xlu0.b32.cont [10/16] 0.0, 128
    %491 = vxpose.xlu0.b32.cont [11/16] 0.0, 128
    %492 = vxpose.xlu0.b32.cont [12/16] 0.0, 128
    %493 = vxpose.xlu0.b32.cont [13/16] 0.0, 128
    %494 = vxpose.xlu0.b32.cont [14/16] 0.0, 128
    %495 = vxpose.xlu0.b32.cont [15/16] 0.0, 128
    %496 = vxpose.xlu0.b32.end [16/16] 0.0, 128
    %v497 = vpop.trf.xlu0
    %v498 = vpop.trf.xlu0
    %v499 = vpop.trf.xlu0
    %v500 = vpop.trf.xlu0
    %v501 = vpop.trf.xlu0
    %v502 = vpop.trf.xlu0
    %v503 = vpop.trf.xlu0
    %v504 = vpop.trf.xlu0
    %v505 = vpop.trf.xlu0
    %v506 = vpop.trf.xlu0
    %v507 = vpop.trf.xlu0
    %v508 = vpop.trf.xlu0
    %v509 = vpop.trf.xlu0
    %v510 = vpop.trf.xlu0
    %v511 = vpop.trf.xlu0
    %v512 = vpop.trf.xlu0
    %513 = vrot.lane.b32.xlu0 %v125, 64
    %v514 = vpop.permute.xlu0 %513
    %515 = vrot.lane.b32.xlu0 %v130, 64
    %v516 = vpop.permute.xlu0 %515
    %v520 = vsel %vm354, %v497, 0
    %v523 = vsel %vm354, %v498, 0
    %525 = vmatprep.subr.mxu0 0.0
    %526 = vmatpush1.msra.mxu0 %v514
    %527 = vmatprep.subr.mxu0 0.0
    %528 = vmatpush1.msra.mxu0 %v516
    %529 = vmatprep.subr.mxu0 0.0
    %530 = vmatpush1.msra.mxu0 0.0
    %531 = vmatprep.subr.mxu0 0.0
    %532 = vmatpush1.msra.mxu0 0.0
    %533 = vmatprep.subr.mxu0 0.0
    %534 = vmatpush1.msra.mxu0 0.0
    %535 = vmatprep.subr.mxu0 0.0
    %536 = vmatpush1.msra.mxu0 0.0
    %537 = vmatprep.subr.mxu0 0.0
    %538 = vmatpush1.msra.mxu0 0.0
    %539 = vmatprep.subr.mxu0 0.0
    %540 = vmatpush1.msra.mxu0 0.0
    %541 = vmatprep.subr.mxu0 0.0
    %542 = vmatpush1.msra.mxu0 0.0
    %543 = vmatprep.subr.mxu0 0.0
    %544 = vmatpush1.msra.mxu0 0.0
    %545 = vmatprep.subr.mxu0 0.0
    %546 = vmatpush1.msra.mxu0 0.0
    %547 = vmatprep.subr.mxu0 0.0
    %548 = vmatpush1.msra.mxu0 0.0
    %549 = vmatprep.subr.mxu0 0.0
    %550 = vmatpush1.msra.mxu0 0.0
    %551 = vmatprep.subr.mxu0 0.0
    %552 = vmatpush1.msra.mxu0 0.0
    %553 = vmatprep.subr.mxu0 0.0
    %554 = vmatpush1.msra.mxu0 0.0
    %555 = vmatprep.subr.mxu0 0.0
    %556 = vmatpush1.msra.mxu0 0.0
    %557 = vmatprep.subr.mxu0 0.0
    %558 = vmatpush1.msra.mxu0 0.0
    %559 = vmatprep.subr.mxu0 0.0
    %560 = vmatpush1.msra.mxu0 0.0
    %561 = vmatprep.subr.mxu0 0.0
    %562 = vmatpush1.msra.mxu0 0.0
    %563 = vmatprep.subr.mxu0 0.0
    %564 = vmatpush1.msra.mxu0 0.0
    %565 = vmatprep.subr.mxu0 0.0
    %566 = vmatpush1.msra.mxu0 0.0
    %567 = vmatprep.subr.mxu0 0.0
    %568 = vmatpush1.msra.mxu0 0.0
    %569 = vmatprep.subr.mxu0 0.0
    %570 = vmatpush1.msra.mxu0 0.0
    %571 = vmatprep.subr.mxu0 0.0
    %572 = vmatpush1.msra.mxu0 0.0
    %573 = vmatprep.subr.mxu0 0.0
    %574 = vmatpush1.msra.mxu0 0.0
    %575 = vmatprep.subr.mxu0 0.0
    %576 = vmatpush1.msra.mxu0 0.0
    %577 = vmatprep.subr.mxu0 0.0
    %578 = vmatpush1.msra.mxu0 0.0
    %579 = vmatprep.subr.mxu0 0.0
    %580 = vmatpush1.msra.mxu0 0.0
    %581 = vmatprep.subr.mxu0 0.0
    %582 = vmatpush1.msra.mxu0 0.0
    %583 = vmatprep.subr.mxu0 0.0
    %584 = vmatpush1.msra.mxu0 0.0
    %585 = vmatprep.subr.mxu0 0.0
    %586 = vmatpush1.msra.mxu0 0.0
    %587 = vmatprep.subr.mxu0 0.0
    %588 = vmatpush1.msra.mxu0 0.0
    %589 = vmatprep.mubr.f32.mxu0 0.0
    %590 = vmatmul.mubr.f32.gmra.mrb[0].mxu0 %v520
    %v591 = vpop.f32.mrb[0].mxu0
    %v592 = vadd.f32 0.0, %v591
    %v593 = vpop.f32.mrb[0].mxu0
    %594 = vmatprep.mubr.f32.mxu0 0.0
    %595 = vmatmul.mubr.f32.gmra.mrb[0].mxu0 %v523
    %v596 = vpop.f32.mrb[0].mxu0
    %v597 = vadd.f32 0.0, %v596
    %v598 = vpop.f32.mrb[0].mxu0
    %599 = vdwg.mxu0
    %600 = vrot.lane.b32.xlu0 %v125, 96
    %v601 = vpop.permute.xlu0 %600
    %602 = vrot.lane.b32.xlu0 %v130, 96
    %v603 = vpop.permute.xlu0 %602
    %604 = vrot.lane.b32.xlu0 %v229, 96
    %v605 = vpop.permute.xlu0 %604
    %606 = vrot.lane.b32.xlu0 %v234, 96
    %v607 = vpop.permute.xlu0 %606
    %v608 = vsel %vm45, %v601, 0
    %v610 = vsel %vm45, %v603, 0
    %v612 = vsel %vm45, %v605, 0
    %v614 = vsel %vm45, %v607, 0
    %616 = vmatprep.subr.mxu0 0.0
    %617 = vmatpush1.xpose.msra.mxu0 %v612
    %618 = vmatprep.subr.mxu0 0.0
    %619 = vmatpush1.xpose.msra.mxu0 %v614
    %620 = vmatprep.subr.mxu0 0.0
    %621 = vmatpush1.xpose.msra.mxu0 0.0
    %622 = vmatprep.subr.mxu0 0.0
    %623 = vmatpush1.xpose.msra.mxu0 0.0
    %624 = vmatprep.subr.mxu0 0.0
    %625 = vmatpush1.xpose.msra.mxu0 0.0
    %626 = vmatprep.subr.mxu0 0.0
    %627 = vmatpush1.xpose.msra.mxu0 0.0
    %628 = vmatprep.subr.mxu0 0.0
    %629 = vmatpush1.xpose.msra.mxu0 0.0
    %630 = vmatprep.subr.mxu0 0.0
    %631 = vmatpush1.xpose.msra.mxu0 0.0
    %632 = vmatprep.subr.mxu0 0.0
    %633 = vmatpush1.xpose.msra.mxu0 0.0
    %634 = vmatprep.subr.mxu0 0.0
    %635 = vmatpush1.xpose.msra.mxu0 0.0
    %636 = vmatprep.subr.mxu0 0.0
    %637 = vmatpush1.xpose.msra.mxu0 0.0
    %638 = vmatprep.subr.mxu0 0.0
    %639 = vmatpush1.xpose.msra.mxu0 0.0
    %640 = vmatprep.subr.mxu0 0.0
    %641 = vmatpush1.xpose.msra.mxu0 0.0
    %642 = vmatprep.subr.mxu0 0.0
    %643 = vmatpush1.xpose.msra.mxu0 0.0
    %644 = vmatprep.subr.mxu0 0.0
    %645 = vmatpush1.xpose.msra.mxu0 0.0
    %646 = vmatprep.subr.mxu0 0.0
    %647 = vmatpush1.xpose.msra.mxu0 0.0
    %648 = vmatprep.subr.mxu0 0.0
    %649 = vmatpush1.xpose.msra.mxu0 0.0
    %650 = vmatprep.subr.mxu0 0.0
    %651 = vmatpush1.xpose.msra.mxu0 0.0
    %652 = vmatprep.subr.mxu0 0.0
    %653 = vmatpush1.xpose.msra.mxu0 0.0
    %654 = vmatprep.subr.mxu0 0.0
    %655 = vmatpush1.xpose.msra.mxu0 0.0
    %656 = vmatprep.subr.mxu0 0.0
    %657 = vmatpush1.xpose.msra.mxu0 0.0
    %658 = vmatprep.subr.mxu0 0.0
    %659 = vmatpush1.xpose.msra.mxu0 0.0
    %660 = vmatprep.subr.mxu0 0.0
    %661 = vmatpush1.xpose.msra.mxu0 0.0
    %662 = vmatprep.subr.mxu0 0.0
    %663 = vmatpush1.xpose.msra.mxu0 0.0
    %664 = vmatprep.subr.mxu0 0.0
    %665 = vmatpush1.xpose.msra.mxu0 0.0
    %666 = vmatprep.subr.mxu0 0.0
    %667 = vmatpush1.xpose.msra.mxu0 0.0
    %668 = vmatprep.subr.mxu0 0.0
    %669 = vmatpush1.xpose.msra.mxu0 0.0
    %670 = vmatprep.subr.mxu0 0.0
    %671 = vmatpush1.xpose.msra.mxu0 0.0
    %672 = vmatprep.subr.mxu0 0.0
    %673 = vmatpush1.xpose.msra.mxu0 0.0
    %674 = vmatprep.subr.mxu0 0.0
    %675 = vmatpush1.xpose.msra.mxu0 0.0
    %676 = vmatprep.subr.mxu0 0.0
    %677 = vmatpush1.xpose.msra.mxu0 0.0
    %678 = vmatprep.subr.mxu0 0.0
    %679 = vmatpush1.xpose.msra.mxu0 0.0
    %680 = vmatprep.mubr.f32.mxu0 0.0
    %681 = vmatmul.mubr.f32.gmra.mrb[0].mxu0 %v608
    %v682 = vpop.f32.mrb[0].mxu0
    %v683 = vadd.f32 0.0, %v682
    %v684 = vpop.f32.mrb[0].mxu0
    %685 = vmatprep.mubr.f32.mxu0 0.0
    %686 = vmatmul.mubr.f32.gmra.mrb[0].mxu0 %v610
    %v687 = vpop.f32.mrb[0].mxu0
    %v688 = vadd.f32 0.0, %v687
    %v689 = vpop.f32.mrb[0].mxu0
    %690 = vdwg.mxu0
    %v691 = vmul.f32 %v683, 0.17677669
    %v692 = vmul.f32 %v688, 0.17677669
    %v693 = vsel %vm354, %v691, -inf
    %v694 = vsel %vm354, %v692, -inf
    %v695 = vmax.f32 %v693, %v694
    %696 = vmax.xlane.f32.xlu0 %v695
    %v697 = vpop.xlane.xlu0 %696
    %v698 = vrot.slane %v697, 4
    %v699 = vmax.f32 %v697, %v698
    %v700 = vrot.slane %v699, 2
    %v701 = vmax.f32 %v699, %v700
    %v702 = vrot.slane %v701, 1
    %v703 = vmax.f32 %v701, %v702
    %s704 = vtos %v703
    %v705 = vstv %s704
    %v706 = vsub.f32 %v691, %v705
    %v707 = vsub.f32 %v692, %v705
    %v708 = vmul.f32 %v706, 1.442695
    %v709 = vpow.pop %v708
    %v710 = vmul.f32 %v707, 1.442695
    %v711 = vpow.pop %v710
    %v712 = vsel %vm354, %v709, 0.0
    %713 = vadd.xlane.f32.xlu0 %v712
    %v714 = vpop.xlane.xlu0 %713
    %v715 = vsel %vm354, %v711, 0.0
    %716 = vadd.xlane.f32.xlu0 %v715
    %v717 = vpop.xlane.xlu0 %716
    %v718 = vrcp.pop %v714
    %v719 = vrcp.pop %v717
    %v720 = vadd.f32 %v712, %v715
    %v721 = vrot.slane %v720, 4
    %v722 = vadd.f32 %v720, %v721
    %v723 = vrot.slane %v722, 2
    %v724 = vadd.f32 %v722, %v723
    %v725 = vrot.slane %v724, 1
    %v726 = vadd.f32 %v724, %v725
    %v727 = vrcp.pop %v726
    %v728 = vmul.f32 %v709, %v718
    %v729 = vmul.f32 %v711, %v719
    %v730 = vmul.f32 %v709, %v727
    %v731 = vmul.f32 %v711, %v727
    %732 = vrot.lane.b32.xlu0 %v229, 32
    %v733 = vpop.permute.xlu0 %732
    %734 = vrot.lane.b32.xlu0 %v234, 32
    %v735 = vpop.permute.xlu0 %734
    %v739 = vsel %vm354, %v728, 0
    %v742 = vsel %vm354, %v729, 0
    %744 = vmatprep.subr.mxu0 0.0
    %745 = vmatpush1.msra.mxu0 %v733
    %746 = vmatprep.subr.mxu0 0.0
    %747 = vmatpush1.msra.mxu0 %v735
    %748 = vmatprep.subr.mxu0 0.0
    %749 = vmatpush1.msra.mxu0 0.0
    %750 = vmatprep.subr.mxu0 0.0
    %751 = vmatpush1.msra.mxu0 0.0
    %752 = vmatprep.subr.mxu0 0.0
    %753 = vmatpush1.msra.mxu0 0.0
    %754 = vmatprep.subr.mxu0 0.0
    %755 = vmatpush1.msra.mxu0 0.0
    %756 = vmatprep.subr.mxu0 0.0
    %757 = vmatpush1.msra.mxu0 0.0
    %758 = vmatprep.subr.mxu0 0.0
    %759 = vmatpush1.msra.mxu0 0.0
    %760 = vmatprep.subr.mxu0 0.0
    %761 = vmatpush1.msra.mxu0 0.0
    %762 = vmatprep.subr.mxu0 0.0
    %763 = vmatpush1.msra.mxu0 0.0
    %764 = vmatprep.subr.mxu0 0.0
    %765 = vmatpush1.msra.mxu0 0.0
    %766 = vmatprep.subr.mxu0 0.0
    %767 = vmatpush1.msra.mxu0 0.0
    %768 = vmatprep.subr.mxu0 0.0
    %769 = vmatpush1.msra.mxu0 0.0
    %770 = vmatprep.subr.mxu0 0.0
    %771 = vmatpush1.msra.mxu0 0.0
    %772 = vmatprep.subr.mxu0 0.0
    %773 = vmatpush1.msra.mxu0 0.0
    %774 = vmatprep.subr.mxu0 0.0
    %775 = vmatpush1.msra.mxu0 0.0
    %776 = vmatprep.subr.mxu0 0.0
    %777 = vmatpush1.msra.mxu0 0.0
    %778 = vmatprep.subr.mxu0 0.0
    %779 = vmatpush1.msra.mxu0 0.0
    %780 = vmatprep.subr.mxu0 0.0
    %781 = vmatpush1.msra.mxu0 0.0
    %782 = vmatprep.subr.mxu0 0.0
    %783 = vmatpush1.msra.mxu0 0.0
    %784 = vmatprep.subr.mxu0 0.0
    %785 = vmatpush1.msra.mxu0 0.0
    %786 = vmatprep.subr.mxu0 0.0
    %787 = vmatpush1.msra.mxu0 0.0
    %788 = vmatprep.subr.mxu0 0.0
    %789 = vmatpush1.msra.mxu0 0.0
    %790 = vmatprep.subr.mxu0 0.0
    %791 = vmatpush1.msra.mxu0 0.0
    %792 = vmatprep.subr.mxu0 0.0
    %793 = vmatpush1.msra.mxu0 0.0
    %794 = vmatprep.subr.mxu0 0.0
    %795 = vmatpush1.msra.mxu0 0.0
    %796 = vmatprep.subr.mxu0 0.0
    %797 = vmatpush1.msra.mxu0 0.0
    %798 = vmatprep.subr.mxu0 0.0
    %799 = vmatpush1.msra.mxu0 0.0
    %800 = vmatprep.subr.mxu0 0.0
    %801 = vmatpush1.msra.mxu0 0.0
    %802 = vmatprep.subr.mxu0 0.0
    %803 = vmatpush1.msra.mxu0 0.0
    %804 = vmatprep.subr.mxu0 0.0
    %805 = vmatpush1.msra.mxu0 0.0
    %806 = vmatprep.subr.mxu0 0.0
    %807 = vmatpush1.msra.mxu0 0.0
    %808 = vmatprep.mubr.f32.mxu0 0.0
    %809 = vmatmul.mubr.f32.gmra.mrb[0].mxu0 %v739
    %v810 = vpop.f32.mrb[0].mxu0
    %v811 = vadd.f32 0.0, %v810
    %v812 = vpop.f32.mrb[0].mxu0
    %813 = vmatprep.mubr.f32.mxu0 0.0
    %814 = vmatmul.mubr.f32.gmra.mrb[0].mxu0 %v742
    %v815 = vpop.f32.mrb[0].mxu0
    %v816 = vadd.f32 0.0, %v815
    %v817 = vpop.f32.mrb[0].mxu0
    %818 = vdwg.mxu0
    %819 = vxpose.xlu0.b32.start [1/16] %v730, 128
    %820 = vxpose.xlu0.b32.cont [2/16] %v731, 128
    %821 = vxpose.xlu0.b32.cont [3/16] 0.0, 128
    %822 = vxpose.xlu0.b32.cont [4/16] 0.0, 128
    %823 = vxpose.xlu0.b32.cont [5/16] 0.0, 128
    %824 = vxpose.xlu0.b32.cont [6/16] 0.0, 128
    %825 = vxpose.xlu0.b32.cont [7/16] 0.0, 128
    %826 = vxpose.xlu0.b32.cont [8/16] 0.0, 128
    %827 = vxpose.xlu0.b32.cont [9/16] 0.0, 128
    %828 = vxpose.xlu0.b32.cont [10/16] 0.0, 128
    %829 = vxpose.xlu0.b32.cont [11/16] 0.0, 128
    %830 = vxpose.xlu0.b32.cont [12/16] 0.0, 128
    %831 = vxpose.xlu0.b32.cont [13/16] 0.0, 128
    %832 = vxpose.xlu0.b32.cont [14/16] 0.0, 128
    %833 = vxpose.xlu0.b32.cont [15/16] 0.0, 128
    %834 = vxpose.xlu0.b32.end [16/16] 0.0, 128
    %v835 = vpop.trf.xlu0
    %v836 = vpop.trf.xlu0
    %v837 = vpop.trf.xlu0
    %v838 = vpop.trf.xlu0
    %v839 = vpop.trf.xlu0
    %v840 = vpop.trf.xlu0
    %v841 = vpop.trf.xlu0
    %v842 = vpop.trf.xlu0
    %v843 = vpop.trf.xlu0
    %v844 = vpop.trf.xlu0
    %v845 = vpop.trf.xlu0
    %v846 = vpop.trf.xlu0
    %v847 = vpop.trf.xlu0
    %v848 = vpop.trf.xlu0
    %v849 = vpop.trf.xlu0
    %v850 = vpop.trf.xlu0
    %851 = vrot.lane.b32.xlu0 %v125, 32
    %v852 = vpop.permute.xlu0 %851
    %853 = vrot.lane.b32.xlu0 %v130, 32
    %v854 = vpop.permute.xlu0 %853
    %v858 = vsel %vm354, %v835, 0
    %v861 = vsel %vm354, %v836, 0
    %863 = vmatprep.subr.mxu0 0.0
    %864 = vmatpush1.msra.mxu0 %v852
    %865 = vmatprep.subr.mxu0 0.0
    %866 = vmatpush1.msra.mxu0 %v854
    %867 = vmatprep.subr.mxu0 0.0
    %868 = vmatpush1.msra.mxu0 0.0
    %869 = vmatprep.subr.mxu0 0.0
    %870 = vmatpush1.msra.mxu0 0.0
    %871 = vmatprep.subr.mxu0 0.0
    %872 = vmatpush1.msra.mxu0 0.0
    %873 = vmatprep.subr.mxu0 0.0
    %874 = vmatpush1.msra.mxu0 0.0
    %875 = vmatprep.subr.mxu0 0.0
    %876 = vmatpush1.msra.mxu0 0.0
    %877 = vmatprep.subr.mxu0 0.0
    %878 = vmatpush1.msra.mxu0 0.0
    %879 = vmatprep.subr.mxu0 0.0
    %880 = vmatpush1.msra.mxu0 0.0
    %881 = vmatprep.subr.mxu0 0.0
    %882 = vmatpush1.msra.mxu0 0.0
    %883 = vmatprep.subr.mxu0 0.0
    %884 = vmatpush1.msra.mxu0 0.0
    %885 = vmatprep.subr.mxu0 0.0
    %886 = vmatpush1.msra.mxu0 0.0
    %887 = vmatprep.subr.mxu0 0.0
    %888 = vmatpush1.msra.mxu0 0.0
    %889 = vmatprep.subr.mxu0 0.0
    %890 = vmatpush1.msra.mxu0 0.0
    %891 = vmatprep.subr.mxu0 0.0
    %892 = vmatpush1.msra.mxu0 0.0
    %893 = vmatprep.subr.mxu0 0.0
    %894 = vmatpush1.msra.mxu0 0.0
    %895 = vmatprep.subr.mxu0 0.0
    %896 = vmatpush1.msra.mxu0 0.0
    %897 = vmatprep.subr.mxu0 0.0
    %898 = vmatpush1.msra.mxu0 0.0
    %899 = vmatprep.subr.mxu0 0.0
    %900 = vmatpush1.msra.mxu0 0.0
    %901 = vmatprep.subr.mxu0 0.0
    %902 = vmatpush1.msra.mxu0 0.0
    %903 = vmatprep.subr.mxu0 0.0
    %904 = vmatpush1.msra.mxu0 0.0
    %905 = vmatprep.subr.mxu0 0.0
    %906 = vmatpush1.msra.mxu0 0.0
    %907 = vmatprep.subr.mxu0 0.0
    %908 = vmatpush1.msra.mxu0 0.0
    %909 = vmatprep.subr.mxu0 0.0
    %910 = vmatpush1.msra.mxu0 0.0
    %911 = vmatprep.subr.mxu0 0.0
    %912 = vmatpush1.msra.mxu0 0.0
    %913 = vmatprep.subr.mxu0 0.0
    %914 = vmatpush1.msra.mxu0 0.0
    %915 = vmatprep.subr.mxu0 0.0
    %916 = vmatpush1.msra.mxu0 0.0
    %917 = vmatprep.subr.mxu0 0.0
    %918 = vmatpush1.msra.mxu0 0.0
    %919 = vmatprep.subr.mxu0 0.0
    %920 = vmatpush1.msra.mxu0 0.0
    %921 = vmatprep.subr.mxu0 0.0
    %922 = vmatpush1.msra.mxu0 0.0
    %923 = vmatprep.subr.mxu0 0.0
    %924 = vmatpush1.msra.mxu0 0.0
    %925 = vmatprep.subr.mxu0 0.0
    %926 = vmatpush1.msra.mxu0 0.0
    %927 = vmatprep.mubr.f32.mxu0 0.0
    %928 = vmatmul.mubr.f32.gmra.mrb[0].mxu0 %v858
    %v929 = vpop.f32.mrb[0].mxu0
    %v930 = vadd.f32 0.0, %v929
    %v931 = vpop.f32.mrb[0].mxu0
    %932 = vmatprep.mubr.f32.mxu0 0.0
    %933 = vmatmul.mubr.f32.gmra.mrb[0].mxu0 %v861
    %v934 = vpop.f32.mrb[0].mxu0
    %v935 = vadd.f32 0.0, %v934
    %v936 = vpop.f32.mrb[0].mxu0
    %937 = vdwg.mxu0
    %v939 = vsel %vm45, %v811, 0
    %v942 = vsel %vm45, %v816, 0
    %944 = vmatprep.subr.mxu0 0.0
    %945 = vmatpush1.msra.mxu0 %v251
    %946 = vmatprep.subr.mxu0 0.0
    %947 = vmatpush1.msra.mxu0 %v252
    %948 = vmatprep.subr.mxu0 0.0
    %949 = vmatpush1.msra.mxu0 %v253
    %950 = vmatprep.subr.mxu0 0.0
    %951 = vmatpush1.msra.mxu0 %v254
    %952 = vmatprep.subr.mxu0 0.0
    %953 = vmatpush1.msra.mxu0 0.0
    %954 = vmatprep.subr.mxu0 0.0
    %955 = vmatpush1.msra.mxu0 0.0
    %956 = vmatprep.subr.mxu0 0.0
    %957 = vmatpush1.msra.mxu0 0.0
    %958 = vmatprep.subr.mxu0 0.0
    %959 = vmatpush1.msra.mxu0 0.0
    %960 = vmatprep.subr.mxu0 0.0
    %961 = vmatpush1.msra.mxu0 0.0
    %962 = vmatprep.subr.mxu0 0.0
    %963 = vmatpush1.msra.mxu0 0.0
    %964 = vmatprep.subr.mxu0 0.0
    %965 = vmatpush1.msra.mxu0 0.0
    %966 = vmatprep.subr.mxu0 0.0
    %967 = vmatpush1.msra.mxu0 0.0
    %968 = vmatprep.subr.mxu0 0.0
    %969 = vmatpush1.msra.mxu0 0.0
    %970 = vmatprep.subr.mxu0 0.0
    %971 = vmatpush1.msra.mxu0 0.0
    %972 = vmatprep.subr.mxu0 0.0
    %973 = vmatpush1.msra.mxu0 0.0
    %974 = vmatprep.subr.mxu0 0.0
    %975 = vmatpush1.msra.mxu0 0.0
    %976 = vmatprep.subr.mxu0 0.0
    %977 = vmatpush1.msra.mxu0 0.0
    %978 = vmatprep.subr.mxu0 0.0
    %979 = vmatpush1.msra.mxu0 0.0
    %980 = vmatprep.subr.mxu0 0.0
    %981 = vmatpush1.msra.mxu0 0.0
    %982 = vmatprep.subr.mxu0 0.0
    %983 = vmatpush1.msra.mxu0 0.0
    %984 = vmatprep.subr.mxu0 0.0
    %985 = vmatpush1.msra.mxu0 0.0
    %986 = vmatprep.subr.mxu0 0.0
    %987 = vmatpush1.msra.mxu0 0.0
    %988 = vmatprep.subr.mxu0 0.0
    %989 = vmatpush1.msra.mxu0 0.0
    %990 = vmatprep.subr.mxu0 0.0
    %991 = vmatpush1.msra.mxu0 0.0
    %992 = vmatprep.subr.mxu0 0.0
    %993 = vmatpush1.msra.mxu0 0.0
    %994 = vmatprep.subr.mxu0 0.0
    %995 = vmatpush1.msra.mxu0 0.0
    %996 = vmatprep.subr.mxu0 0.0
    %997 = vmatpush1.msra.mxu0 0.0
    %998 = vmatprep.subr.mxu0 0.0
    %999 = vmatpush1.msra.mxu0 0.0
    %1000 = vmatprep.subr.mxu0 0.0
    %1001 = vmatpush1.msra.mxu0 0.0
    %1002 = vmatprep.subr.mxu0 0.0
    %1003 = vmatpush1.msra.mxu0 0.0
    %1004 = vmatprep.subr.mxu0 0.0
    %1005 = vmatpush1.msra.mxu0 0.0
    %1006 = vmatprep.subr.mxu0 0.0
    %1007 = vmatpush1.msra.mxu0 0.0
    %1008 = vmatprep.mubr.f32.mxu0 0.0
    %1009 = vmatmul.mubr.f32.gmra.mrb[0].mxu0 %v939
    %v1010 = vpop.f32.mrb[0].mxu0
    %v1011 = vadd.f32 0.0, %v1010
    %v1012 = vpop.f32.mrb[0].mxu0
    %1013 = vmatprep.mubr.f32.mxu0 0.0
    %1014 = vmatmul.mubr.f32.gmra.mrb[0].mxu0 %v942
    %v1015 = vpop.f32.mrb[0].mxu0
    %v1016 = vadd.f32 0.0, %v1015
    %v1017 = vpop.f32.mrb[0].mxu0
    %1018 = vdwg.mxu0
    %v1020 = vsel %vm45, %v473, 0
    %v1023 = vsel %vm45, %v478, 0
    %1025 = vmatprep.subr.mxu0 0.0
    %1026 = vmatpush1.msra.mxu0 %v247
    %1027 = vmatprep.subr.mxu0 0.0
    %1028 = vmatpush1.msra.mxu0 %v248
    %1029 = vmatprep.subr.mxu0 0.0
    %1030 = vmatpush1.msra.mxu0 %v249
    %1031 = vmatprep.subr.mxu0 0.0
    %1032 = vmatpush1.msra.mxu0 %v250
    %1033 = vmatprep.subr.mxu0 0.0
    %1034 = vmatpush1.msra.mxu0 0.0
    %1035 = vmatprep.subr.mxu0 0.0
    %1036 = vmatpush1.msra.mxu0 0.0
    %1037 = vmatprep.subr.mxu0 0.0
    %1038 = vmatpush1.msra.mxu0 0.0
    %1039 = vmatprep.subr.mxu0 0.0
    %1040 = vmatpush1.msra.mxu0 0.0
    %1041 = vmatprep.subr.mxu0 0.0
    %1042 = vmatpush1.msra.mxu0 0.0
    %1043 = vmatprep.subr.mxu0 0.0
    %1044 = vmatpush1.msra.mxu0 0.0
    %1045 = vmatprep.subr.mxu0 0.0
    %1046 = vmatpush1.msra.mxu0 0.0
    %1047 = vmatprep.subr.mxu0 0.0
    %1048 = vmatpush1.msra.mxu0 0.0
    %1049 = vmatprep.subr.mxu0 0.0
    %1050 = vmatpush1.msra.mxu0 0.0
    %1051 = vmatprep.subr.mxu0 0.0
    %1052 = vmatpush1.msra.mxu0 0.0
    %1053 = vmatprep.subr.mxu0 0.0
    %1054 = vmatpush1.msra.mxu0 0.0
    %1055 = vmatprep.subr.mxu0 0.0
    %1056 = vmatpush1.msra.mxu0 0.0
    %1057 = vmatprep.subr.mxu0 0.0
    %1058 = vmatpush1.msra.mxu0 0.0
    %1059 = vmatprep.subr.mxu0 0.0
    %1060 = vmatpush1.msra.mxu0 0.0
    %1061 = vmatprep.subr.mxu0 0.0
    %1062 = vmatpush1.msra.mxu0 0.0
    %1063 = vmatprep.subr.mxu0 0.0
    %1064 = vmatpush1.msra.mxu0 0.0
    %1065 = vmatprep.subr.mxu0 0.0
    %1066 = vmatpush1.msra.mxu0 0.0
    %1067 = vmatprep.subr.mxu0 0.0
    %1068 = vmatpush1.msra.mxu0 0.0
    %1069 = vmatprep.subr.mxu0 0.0
    %1070 = vmatpush1.msra.mxu0 0.0
    %1071 = vmatprep.subr.mxu0 0.0
    %1072 = vmatpush1.msra.mxu0 0.0
    %1073 = vmatprep.subr.mxu0 0.0
    %1074 = vmatpush1.msra.mxu0 0.0
    %1075 = vmatprep.subr.mxu0 0.0
    %1076 = vmatpush1.msra.mxu0 0.0
    %1077 = vmatprep.subr.mxu0 0.0
    %1078 = vmatpush1.msra.mxu0 0.0
    %1079 = vmatprep.subr.mxu0 0.0
    %1080 = vmatpush1.msra.mxu0 0.0
    %1081 = vmatprep.subr.mxu0 0.0
    %1082 = vmatpush1.msra.mxu0 0.0
    %1083 = vmatprep.subr.mxu0 0.0
    %1084 = vmatpush1.msra.mxu0 0.0
    %1085 = vmatprep.subr.mxu0 0.0
    %1086 = vmatpush1.msra.mxu0 0.0
    %1087 = vmatprep.subr.mxu0 0.0
    %1088 = vmatpush1.msra.mxu0 0.0
    %1089 = vmatprep.mubr.f32.mxu0 0.0
    %1090 = vmatmul.mubr.f32.gmra.mrb[0].mxu0 %v1020
    %v1091 = vpop.f32.mrb[0].mxu0
    %v1092 = vadd.f32 %v1011, %v1091
    %v1093 = vpop.f32.mrb[0].mxu0
    %1094 = vmatprep.mubr.f32.mxu0 0.0
    %1095 = vmatmul.mubr.f32.gmra.mrb[0].mxu0 %v1023
    %v1096 = vpop.f32.mrb[0].mxu0
    %v1097 = vadd.f32 %v1016, %v1096
    %v1098 = vpop.f32.mrb[0].mxu0
    %1099 = vdwg.mxu0
    %v1101 = vsel %vm45, %v930, 0
    %v1104 = vsel %vm45, %v935, 0
    %1106 = vmatprep.subr.mxu0 0.0
    %1107 = vmatpush1.msra.mxu0 %v259
    %1108 = vmatprep.subr.mxu0 0.0
    %1109 = vmatpush1.msra.mxu0 %v260
    %1110 = vmatprep.subr.mxu0 0.0
    %1111 = vmatpush1.msra.mxu0 %v261
    %1112 = vmatprep.subr.mxu0 0.0
    %1113 = vmatpush1.msra.mxu0 %v262
    %1114 = vmatprep.subr.mxu0 0.0
    %1115 = vmatpush1.msra.mxu0 0.0
    %1116 = vmatprep.subr.mxu0 0.0
    %1117 = vmatpush1.msra.mxu0 0.0
    %1118 = vmatprep.subr.mxu0 0.0
    %1119 = vmatpush1.msra.mxu0 0.0
    %1120 = vmatprep.subr.mxu0 0.0
    %1121 = vmatpush1.msra.mxu0 0.0
    %1122 = vmatprep.subr.mxu0 0.0
    %1123 = vmatpush1.msra.mxu0 0.0
    %1124 = vmatprep.subr.mxu0 0.0
    %1125 = vmatpush1.msra.mxu0 0.0
    %1126 = vmatprep.subr.mxu0 0.0
    %1127 = vmatpush1.msra.mxu0 0.0
    %1128 = vmatprep.subr.mxu0 0.0
    %1129 = vmatpush1.msra.mxu0 0.0
    %1130 = vmatprep.subr.mxu0 0.0
    %1131 = vmatpush1.msra.mxu0 0.0
    %1132 = vmatprep.subr.mxu0 0.0
    %1133 = vmatpush1.msra.mxu0 0.0
    %1134 = vmatprep.subr.mxu0 0.0
    %1135 = vmatpush1.msra.mxu0 0.0
    %1136 = vmatprep.subr.mxu0 0.0
    %1137 = vmatpush1.msra.mxu0 0.0
    %1138 = vmatprep.subr.mxu0 0.0
    %1139 = vmatpush1.msra.mxu0 0.0
    %1140 = vmatprep.subr.mxu0 0.0
    %1141 = vmatpush1.msra.mxu0 0.0
    %1142 = vmatprep.subr.mxu0 0.0
    %1143 = vmatpush1.msra.mxu0 0.0
    %1144 = vmatprep.subr.mxu0 0.0
    %1145 = vmatpush1.msra.mxu0 0.0
    %1146 = vmatprep.subr.mxu0 0.0
    %1147 = vmatpush1.msra.mxu0 0.0
    %1148 = vmatprep.subr.mxu0 0.0
    %1149 = vmatpush1.msra.mxu0 0.0
    %1150 = vmatprep.subr.mxu0 0.0
    %1151 = vmatpush1.msra.mxu0 0.0
    %1152 = vmatprep.subr.mxu0 0.0
    %1153 = vmatpush1.msra.mxu0 0.0
    %1154 = vmatprep.subr.mxu0 0.0
    %1155 = vmatpush1.msra.mxu0 0.0
    %1156 = vmatprep.subr.mxu0 0.0
    %1157 = vmatpush1.msra.mxu0 0.0
    %1158 = vmatprep.subr.mxu0 0.0
    %1159 = vmatpush1.msra.mxu0 0.0
    %1160 = vmatprep.subr.mxu0 0.0
    %1161 = vmatpush1.msra.mxu0 0.0
    %1162 = vmatprep.subr.mxu0 0.0
    %1163 = vmatpush1.msra.mxu0 0.0
    %1164 = vmatprep.subr.mxu0 0.0
    %1165 = vmatpush1.msra.mxu0 0.0
    %1166 = vmatprep.subr.mxu0 0.0
    %1167 = vmatpush1.msra.mxu0 0.0
    %1168 = vmatprep.subr.mxu0 0.0
    %1169 = vmatpush1.msra.mxu0 0.0
    %1170 = vmatprep.mubr.f32.mxu0 0.0
    %1171 = vmatmul.mubr.f32.gmra.mrb[0].mxu0 %v1101
    %v1172 = vpop.f32.mrb[0].mxu0
    %v1173 = vadd.f32 0.0, %v1172
    %v1174 = vpop.f32.mrb[0].mxu0
    %1175 = vmatprep.mubr.f32.mxu0 0.0
    %1176 = vmatmul.mubr.f32.gmra.mrb[0].mxu0 %v1104
    %v1177 = vpop.f32.mrb[0].mxu0
    %v1178 = vadd.f32 0.0, %v1177
    %v1179 = vpop.f32.mrb[0].mxu0
    %1180 = vdwg.mxu0
    %v1182 = vsel %vm45, %v592, 0
    %v1185 = vsel %vm45, %v597, 0
    %1187 = vmatprep.subr.mxu0 0.0
    %1188 = vmatpush1.msra.mxu0 %v255
    %1189 = vmatprep.subr.mxu0 0.0
    %1190 = vmatpush1.msra.mxu0 %v256
    %1191 = vmatprep.subr.mxu0 0.0
    %1192 = vmatpush1.msra.mxu0 %v257
    %1193 = vmatprep.subr.mxu0 0.0
    %1194 = vmatpush1.msra.mxu0 %v258
    %1195 = vmatprep.subr.mxu0 0.0
    %1196 = vmatpush1.msra.mxu0 0.0
    %1197 = vmatprep.subr.mxu0 0.0
    %1198 = vmatpush1.msra.mxu0 0.0
    %1199 = vmatprep.subr.mxu0 0.0
    %1200 = vmatpush1.msra.mxu0 0.0
    %1201 = vmatprep.subr.mxu0 0.0
    %1202 = vmatpush1.msra.mxu0 0.0
    %1203 = vmatprep.subr.mxu0 0.0
    %1204 = vmatpush1.msra.mxu0 0.0
    %1205 = vmatprep.subr.mxu0 0.0
    %1206 = vmatpush1.msra.mxu0 0.0
    %1207 = vmatprep.subr.mxu0 0.0
    %1208 = vmatpush1.msra.mxu0 0.0
    %1209 = vmatprep.subr.mxu0 0.0
    %1210 = vmatpush1.msra.mxu0 0.0
    %1211 = vmatprep.subr.mxu0 0.0
    %1212 = vmatpush1.msra.mxu0 0.0
    %1213 = vmatprep.subr.mxu0 0.0
    %1214 = vmatpush1.msra.mxu0 0.0
    %1215 = vmatprep.subr.mxu0 0.0
    %1216 = vmatpush1.msra.mxu0 0.0
    %1217 = vmatprep.subr.mxu0 0.0
    %1218 = vmatpush1.msra.mxu0 0.0
    %1219 = vmatprep.subr.mxu0 0.0
    %1220 = vmatpush1.msra.mxu0 0.0
    %1221 = vmatprep.subr.mxu0 0.0
    %1222 = vmatpush1.msra.mxu0 0.0
    %1223 = vmatprep.subr.mxu0 0.0
    %1224 = vmatpush1.msra.mxu0 0.0
    %1225 = vmatprep.subr.mxu0 0.0
    %1226 = vmatpush1.msra.mxu0 0.0
    %1227 = vmatprep.subr.mxu0 0.0
    %1228 = vmatpush1.msra.mxu0 0.0
    %1229 = vmatprep.subr.mxu0 0.0
    %1230 = vmatpush1.msra.mxu0 0.0
    %1231 = vmatprep.subr.mxu0 0.0
    %1232 = vmatpush1.msra.mxu0 0.0
    %1233 = vmatprep.subr.mxu0 0.0
    %1234 = vmatpush1.msra.mxu0 0.0
    %1235 = vmatprep.subr.mxu0 0.0
    %1236 = vmatpush1.msra.mxu0 0.0
    %1237 = vmatprep.subr.mxu0 0.0
    %1238 = vmatpush1.msra.mxu0 0.0
    %1239 = vmatprep.subr.mxu0 0.0
    %1240 = vmatpush1.msra.mxu0 0.0
    %1241 = vmatprep.subr.mxu0 0.0
    %1242 = vmatpush1.msra.mxu0 0.0
    %1243 = vmatprep.subr.mxu0 0.0
    %1244 = vmatpush1.msra.mxu0 0.0
    %1245 = vmatprep.subr.mxu0 0.0
    %1246 = vmatpush1.msra.mxu0 0.0
    %1247 = vmatprep.subr.mxu0 0.0
    %1248 = vmatpush1.msra.mxu0 0.0
    %1249 = vmatprep.subr.mxu0 0.0
    %1250 = vmatpush1.msra.mxu0 0.0
    %1251 = vmatprep.mubr.f32.mxu0 0.0
    %1252 = vmatmul.mubr.f32.gmra.mrb[0].mxu0 %v1182
    %v1253 = vpop.f32.mrb[0].mxu0
    %v1254 = vadd.f32 %v1173, %v1253
    %v1255 = vpop.f32.mrb[0].mxu0
    %1256 = vmatprep.mubr.f32.mxu0 0.0
    %1257 = vmatmul.mubr.f32.gmra.mrb[0].mxu0 %v1185
    %v1258 = vpop.f32.mrb[0].mxu0
    %v1259 = vadd.f32 %v1178, %v1258
    %v1260 = vpop.f32.mrb[0].mxu0
    %1261 = vdwg.mxu0
    %v1263 = vlaneseq
    %v1264 = vshrl.u32 %v1263, 7
    %v1265 = vsub.s32 0, %v1264
    %v1266 = vrot.slane %v263, %v1265
    %v1268 = vadd.f32 %v1092, %v1266
    %v1269 = vadd.f32 %v1097, %v1266
    %1270 = vst.msk [vmem:[#allocation2] sm:$0xff] %vm45, %v1268
    %1271 = vst.msk [vmem:[#allocation2 + $0x8] sm:$0xff] %vm45, %v1269
    %v1273 = vlaneseq
    %v1274 = vshrl.u32 %v1273, 7
    %v1275 = vsub.s32 0, %v1274
    %v1276 = vrot.slane %v264, %v1275
    %v1278 = vadd.f32 %v1254, %v1276
    %v1279 = vadd.f32 %v1259, %v1276
    %1280 = vst.msk [vmem:[#allocation4] sm:$0xff] %vm149, %v1278
    %1281 = vst.msk [vmem:[#allocation4 + $0x8] sm:$0xff] %vm149, %v1279
    %v1283 = vsel %vm45, %v135, 0
    %v1286 = vsel %vm45, %v140, 0
    %v1289 = vsel %vm45, %v239, 0
    %v1292 = vsel %vm45, %v244, 0
    %1294 = vmatprep.subr.mxu0 0.0
    %1295 = vmatpush1.xpose.msra.mxu0 %v1289
    %1296 = vmatprep.subr.mxu0 0.0
    %1297 = vmatpush1.xpose.msra.mxu0 %v1292
    %1298 = vmatprep.subr.mxu0 0.0
    %1299 = vmatpush1.xpose.msra.mxu0 0.0
    %1300 = vmatprep.subr.mxu0 0.0
    %1301 = vmatpush1.xpose.msra.mxu0 0.0
    %1302 = vmatprep.subr.mxu0 0.0
    %1303 = vmatpush1.xpose.msra.mxu0 0.0
    %1304 = vmatprep.subr.mxu0 0.0
    %1305 = vmatpush1.xpose.msra.mxu0 0.0
    %1306 = vmatprep.subr.mxu0 0.0
    %1307 = vmatpush1.xpose.msra.mxu0 0.0
    %1308 = vmatprep.subr.mxu0 0.0
    %1309 = vmatpush1.xpose.msra.mxu0 0.0
    %1310 = vmatprep.subr.mxu0 0.0
    %1311 = vmatpush1.xpose.msra.mxu0 0.0
    %1312 = vmatprep.subr.mxu0 0.0
    %1313 = vmatpush1.xpose.msra.mxu0 0.0
    %1314 = vmatprep.subr.mxu0 0.0
    %1315 = vmatpush1.xpose.msra.mxu0 0.0
    %1316 = vmatprep.subr.mxu0 0.0
    %1317 = vmatpush1.xpose.msra.mxu0 0.0
    %1318 = vmatprep.subr.mxu0 0.0
    %1319 = vmatpush1.xpose.msra.mxu0 0.0
    %1320 = vmatprep.subr.mxu0 0.0
    %1321 = vmatpush1.xpose.msra.mxu0 0.0
    %1322 = vmatprep.subr.mxu0 0.0
    %1323 = vmatpush1.xpose.msra.mxu0 0.0
    %1324 = vmatprep.subr.mxu0 0.0
    %1325 = vmatpush1.xpose.msra.mxu0 0.0
    %1326 = vmatprep.subr.mxu0 0.0
    %1327 = vmatpush1.xpose.msra.mxu0 0.0
    %1328 = vmatprep.subr.mxu0 0.0
    %1329 = vmatpush1.xpose.msra.mxu0 0.0
    %1330 = vmatprep.subr.mxu0 0.0
    %1331 = vmatpush1.xpose.msra.mxu0 0.0
    %1332 = vmatprep.subr.mxu0 0.0
    %1333 = vmatpush1.xpose.msra.mxu0 0.0
    %1334 = vmatprep.subr.mxu0 0.0
    %1335 = vmatpush1.xpose.msra.mxu0 0.0
    %1336 = vmatprep.subr.mxu0 0.0
    %1337 = vmatpush1.xpose.msra.mxu0 0.0
    %1338 = vmatprep.subr.mxu0 0.0
    %1339 = vmatpush1.xpose.msra.mxu0 0.0
    %1340 = vmatprep.subr.mxu0 0.0
    %1341 = vmatpush1.xpose.msra.mxu0 0.0
    %1342 = vmatprep.subr.mxu0 0.0
    %1343 = vmatpush1.xpose.msra.mxu0 0.0
    %1344 = vmatprep.subr.mxu0 0.0
    %1345 = vmatpush1.xpose.msra.mxu0 0.0
    %1346 = vmatprep.subr.mxu0 0.0
    %1347 = vmatpush1.xpose.msra.mxu0 0.0
    %1348 = vmatprep.subr.mxu0 0.0
    %1349 = vmatpush1.xpose.msra.mxu0 0.0
    %1350 = vmatprep.subr.mxu0 0.0
    %1351 = vmatpush1.xpose.msra.mxu0 0.0
    %1352 = vmatprep.subr.mxu0 0.0
    %1353 = vmatpush1.xpose.msra.mxu0 0.0
    %1354 = vmatprep.subr.mxu0 0.0
    %1355 = vmatpush1.xpose.msra.mxu0 0.0
    %1356 = vmatprep.subr.mxu0 0.0
    %1357 = vmatpush1.xpose.msra.mxu0 0.0
    %1358 = vmatprep.mubr.f32.mxu0 0.0
    %1359 = vmatmul.mubr.f32.gmra.mrb[0].mxu0 %v1283
    %v1360 = vpop.f32.mrb[0].mxu0
    %v1361 = vadd.f32 0.0, %v1360
    %v1362 = vpop.f32.mrb[0].mxu0
    %1363 = vmatprep.mubr.f32.mxu0 0.0
    %1364 = vmatmul.mubr.f32.gmra.mrb[0].mxu0 %v1286
    %v1365 = vpop.f32.mrb[0].mxu0
    %v1366 = vadd.f32 0.0, %v1365
    %v1367 = vpop.f32.mrb[0].mxu0
    %1368 = vdwg.mxu0
    %v1369 = vmul.f32 %v1361, 0.17677669
    %v1370 = vmul.f32 %v1366, 0.17677669
    %v1371 = vsel %vm354, %v1369, -inf
    %v1372 = vsel %vm354, %v1370, -inf
    %v1373 = vmax.f32 %v1371, %v1372
    %1374 = vmax.xlane.f32.xlu0 %v1373
    %v1375 = vpop.xlane.xlu0 %1374
    %v1376 = vrot.slane %v1375, 4
    %v1377 = vmax.f32 %v1375, %v1376
    %v1378 = vrot.slane %v1377, 2
    %v1379 = vmax.f32 %v1377, %v1378
    %v1380 = vrot.slane %v1379, 1
    %v1381 = vmax.f32 %v1379, %v1380
    %s1382 = vtos %v1381
    %v1383 = vstv %s1382
    %v1384 = vsub.f32 %v1369, %v1383
    %v1385 = vsub.f32 %v1370, %v1383
    %v1386 = vmul.f32 %v1384, 1.442695
    %v1387 = vpow.pop %v1386
    %v1388 = vmul.f32 %v1385, 1.442695
    %v1389 = vpow.pop %v1388
    %v1390 = vsel %vm354, %v1387, 0.0
    %1391 = vadd.xlane.f32.xlu0 %v1390
    %v1392 = vpop.xlane.xlu0 %1391
    %v1393 = vsel %vm354, %v1389, 0.0
    %1394 = vadd.xlane.f32.xlu0 %v1393
    %v1395 = vpop.xlane.xlu0 %1394
    %v1396 = vrcp.pop %v1392
    %v1397 = vrcp.pop %v1395
    %v1398 = vadd.f32 %v1390, %v1393
    %v1399 = vrot.slane %v1398, 4
    %v1400 = vadd.f32 %v1398, %v1399
    %v1401 = vrot.slane %v1400, 2
    %v1402 = vadd.f32 %v1400, %v1401
    %v1403 = vrot.slane %v1402, 1
    %v1404 = vadd.f32 %v1402, %v1403
    %v1405 = vrcp.pop %v1404
    %v1406 = vmul.f32 %v1387, %v1396
    %v1407 = vmul.f32 %v1389, %v1397
    %v1408 = vmul.f32 %v1387, %v1405
    %v1409 = vmul.f32 %v1389, %v1405
    %1410 = vrot.lane.b32.xlu0 %v239, 64
    %v1411 = vpop.permute.xlu0 %1410
    %1412 = vrot.lane.b32.xlu0 %v244, 64
    %v1413 = vpop.permute.xlu0 %1412
    %v1417 = vsel %vm354, %v1406, 0
    %v1420 = vsel %vm354, %v1407, 0
    %1422 = vmatprep.subr.mxu0 0.0
    %1423 = vmatpush1.msra.mxu0 %v1411
    %1424 = vmatprep.subr.mxu0 0.0
    %1425 = vmatpush1.msra.mxu0 %v1413
    %1426 = vmatprep.subr.mxu0 0.0
    %1427 = vmatpush1.msra.mxu0 0.0
    %1428 = vmatprep.subr.mxu0 0.0
    %1429 = vmatpush1.msra.mxu0 0.0
    %1430 = vmatprep.subr.mxu0 0.0
    %1431 = vmatpush1.msra.mxu0 0.0
    %1432 = vmatprep.subr.mxu0 0.0
    %1433 = vmatpush1.msra.mxu0 0.0
    %1434 = vmatprep.subr.mxu0 0.0
    %1435 = vmatpush1.msra.mxu0 0.0
    %1436 = vmatprep.subr.mxu0 0.0
    %1437 = vmatpush1.msra.mxu0 0.0
    %1438 = vmatprep.subr.mxu0 0.0
    %1439 = vmatpush1.msra.mxu0 0.0
    %1440 = vmatprep.subr.mxu0 0.0
    %1441 = vmatpush1.msra.mxu0 0.0
    %1442 = vmatprep.subr.mxu0 0.0
    %1443 = vmatpush1.msra.mxu0 0.0
    %1444 = vmatprep.subr.mxu0 0.0
    %1445 = vmatpush1.msra.mxu0 0.0
    %1446 = vmatprep.subr.mxu0 0.0
    %1447 = vmatpush1.msra.mxu0 0.0
    %1448 = vmatprep.subr.mxu0 0.0
    %1449 = vmatpush1.msra.mxu0 0.0
    %1450 = vmatprep.subr.mxu0 0.0
    %1451 = vmatpush1.msra.mxu0 0.0
    %1452 = vmatprep.subr.mxu0 0.0
    %1453 = vmatpush1.msra.mxu0 0.0
    %1454 = vmatprep.subr.mxu0 0.0
    %1455 = vmatpush1.msra.mxu0 0.0
    %1456 = vmatprep.subr.mxu0 0.0
    %1457 = vmatpush1.msra.mxu0 0.0
    %1458 = vmatprep.subr.mxu0 0.0
    %1459 = vmatpush1.msra.mxu0 0.0
    %1460 = vmatprep.subr.mxu0 0.0
    %1461 = vmatpush1.msra.mxu0 0.0
    %1462 = vmatprep.subr.mxu0 0.0
    %1463 = vmatpush1.msra.mxu0 0.0
    %1464 = vmatprep.subr.mxu0 0.0
    %1465 = vmatpush1.msra.mxu0 0.0
    %1466 = vmatprep.subr.mxu0 0.0
    %1467 = vmatpush1.msra.mxu0 0.0
    %1468 = vmatprep.subr.mxu0 0.0
    %1469 = vmatpush1.msra.mxu0 0.0
    %1470 = vmatprep.subr.mxu0 0.0
    %1471 = vmatpush1.msra.mxu0 0.0
    %1472 = vmatprep.subr.mxu0 0.0
    %1473 = vmatpush1.msra.mxu0 0.0
    %1474 = vmatprep.subr.mxu0 0.0
    %1475 = vmatpush1.msra.mxu0 0.0
    %1476 = vmatprep.subr.mxu0 0.0
    %1477 = vmatpush1.msra.mxu0 0.0
    %1478 = vmatprep.subr.mxu0 0.0
    %1479 = vmatpush1.msra.mxu0 0.0
    %1480 = vmatprep.subr.mxu0 0.0
    %1481 = vmatpush1.msra.mxu0 0.0
    %1482 = vmatprep.subr.mxu0 0.0
    %1483 = vmatpush1.msra.mxu0 0.0
    %1484 = vmatprep.subr.mxu0 0.0
    %1485 = vmatpush1.msra.mxu0 0.0
    %1486 = vmatprep.mubr.f32.mxu0 0.0
    %1487 = vmatmul.mubr.f32.gmra.mrb[0].mxu0 %v1417
    %v1488 = vpop.f32.mrb[0].mxu0
    %v1489 = vadd.f32 0.0, %v1488
    %v1490 = vpop.f32.mrb[0].mxu0
    %1491 = vmatprep.mubr.f32.mxu0 0.0
    %1492 = vmatmul.mubr.f32.gmra.mrb[0].mxu0 %v1420
    %v1493 = vpop.f32.mrb[0].mxu0
    %v1494 = vadd.f32 0.0, %v1493
    %v1495 = vpop.f32.mrb[0].mxu0
    %1496 = vdwg.mxu0
    %1497 = vxpose.xlu0.b32.start [1/16] %v1408, 128
    %1498 = vxpose.xlu0.b32.cont [2/16] %v1409, 128
    %1499 = vxpose.xlu0.b32.cont [3/16] 0.0, 128
    %1500 = vxpose.xlu0.b32.cont [4/16] 0.0, 128
    %1501 = vxpose.xlu0.b32.cont [5/16] 0.0, 128
    %1502 = vxpose.xlu0.b32.cont [6/16] 0.0, 128
    %1503 = vxpose.xlu0.b32.cont [7/16] 0.0, 128
    %1504 = vxpose.xlu0.b32.cont [8/16] 0.0, 128
    %1505 = vxpose.xlu0.b32.cont [9/16] 0.0, 128
    %1506 = vxpose.xlu0.b32.cont [10/16] 0.0, 128
    %1507 = vxpose.xlu0.b32.cont [11/16] 0.0, 128
    %1508 = vxpose.xlu0.b32.cont [12/16] 0.0, 128
    %1509 = vxpose.xlu0.b32.cont [13/16] 0.0, 128
    %1510 = vxpose.xlu0.b32.cont [14/16] 0.0, 128
    %1511 = vxpose.xlu0.b32.cont [15/16] 0.0, 128
    %1512 = vxpose.xlu0.b32.end [16/16] 0.0, 128
    %v1513 = vpop.trf.xlu0
    %v1514 = vpop.trf.xlu0
    %v1515 = vpop.trf.xlu0
    %v1516 = vpop.trf.xlu0
    %v1517 = vpop.trf.xlu0
    %v1518 = vpop.trf.xlu0
    %v1519 = vpop.trf.xlu0
    %v1520 = vpop.trf.xlu0
    %v1521 = vpop.trf.xlu0
    %v1522 = vpop.trf.xlu0
    %v1523 = vpop.trf.xlu0
    %v1524 = vpop.trf.xlu0
    %v1525 = vpop.trf.xlu0
    %v1526 = vpop.trf.xlu0
    %v1527 = vpop.trf.xlu0
    %v1528 = vpop.trf.xlu0
    %1529 = vrot.lane.b32.xlu0 %v135, 64
    %v1530 = vpop.permute.xlu0 %1529
    %1531 = vrot.lane.b32.xlu0 %v140, 64
    %v1532 = vpop.permute.xlu0 %1531
    %v1536 = vsel %vm354, %v1513, 0
    %v1539 = vsel %vm354, %v1514, 0
    %1541 = vmatprep.subr.mxu0 0.0
    %1542 = vmatpush1.msra.mxu0 %v1530
    %1543 = vmatprep.subr.mxu0 0.0
    %1544 = vmatpush1.msra.mxu0 %v1532
    %1545 = vmatprep.subr.mxu0 0.0
    %1546 = vmatpush1.msra.mxu0 0.0
    %1547 = vmatprep.subr.mxu0 0.0
    %1548 = vmatpush1.msra.mxu0 0.0
    %1549 = vmatprep.subr.mxu0 0.0
    %1550 = vmatpush1.msra.mxu0 0.0
    %1551 = vmatprep.subr.mxu0 0.0
    %1552 = vmatpush1.msra.mxu0 0.0
    %1553 = vmatprep.subr.mxu0 0.0
    %1554 = vmatpush1.msra.mxu0 0.0
    %1555 = vmatprep.subr.mxu0 0.0
    %1556 = vmatpush1.msra.mxu0 0.0
    %1557 = vmatprep.subr.mxu0 0.0
    %1558 = vmatpush1.msra.mxu0 0.0
    %1559 = vmatprep.subr.mxu0 0.0
    %1560 = vmatpush1.msra.mxu0 0.0
    %1561 = vmatprep.subr.mxu0 0.0
    %1562 = vmatpush1.msra.mxu0 0.0
    %1563 = vmatprep.subr.mxu0 0.0
    %1564 = vmatpush1.msra.mxu0 0.0
    %1565 = vmatprep.subr.mxu0 0.0
    %1566 = vmatpush1.msra.mxu0 0.0
    %1567 = vmatprep.subr.mxu0 0.0
    %1568 = vmatpush1.msra.mxu0 0.0
    %1569 = vmatprep.subr.mxu0 0.0
    %1570 = vmatpush1.msra.mxu0 0.0
    %1571 = vmatprep.subr.mxu0 0.0
    %1572 = vmatpush1.msra.mxu0 0.0
    %1573 = vmatprep.subr.mxu0 0.0
    %1574 = vmatpush1.msra.mxu0 0.0
    %1575 = vmatprep.subr.mxu0 0.0
    %1576 = vmatpush1.msra.mxu0 0.0
    %1577 = vmatprep.subr.mxu0 0.0
    %1578 = vmatpush1.msra.mxu0 0.0
    %1579 = vmatprep.subr.mxu0 0.0
    %1580 = vmatpush1.msra.mxu0 0.0
    %1581 = vmatprep.subr.mxu0 0.0
    %1582 = vmatpush1.msra.mxu0 0.0
    %1583 = vmatprep.subr.mxu0 0.0
    %1584 = vmatpush1.msra.mxu0 0.0
    %1585 = vmatprep.subr.mxu0 0.0
    %1586 = vmatpush1.msra.mxu0 0.0
    %1587 = vmatprep.subr.mxu0 0.0
    %1588 = vmatpush1.msra.mxu0 0.0
    %1589 = vmatprep.subr.mxu0 0.0
    %1590 = vmatpush1.msra.mxu0 0.0
    %1591 = vmatprep.subr.mxu0 0.0
    %1592 = vmatpush1.msra.mxu0 0.0
    %1593 = vmatprep.subr.mxu0 0.0
    %1594 = vmatpush1.msra.mxu0 0.0
    %1595 = vmatprep.subr.mxu0 0.0
    %1596 = vmatpush1.msra.mxu0 0.0
    %1597 = vmatprep.subr.mxu0 0.0
    %1598 = vmatpush1.msra.mxu0 0.0
    %1599 = vmatprep.subr.mxu0 0.0
    %1600 = vmatpush1.msra.mxu0 0.0
    %1601 = vmatprep.subr.mxu0 0.0
    %1602 = vmatpush1.msra.mxu0 0.0
    %1603 = vmatprep.subr.mxu0 0.0
    %1604 = vmatpush1.msra.mxu0 0.0
    %1605 = vmatprep.mubr.f32.mxu0 0.0
    %1606 = vmatmul.mubr.f32.gmra.mrb[0].mxu0 %v1536
    %v1607 = vpop.f32.mrb[0].mxu0
    %v1608 = vadd.f32 0.0, %v1607
    %v1609 = vpop.f32.mrb[0].mxu0
    %1610 = vmatprep.mubr.f32.mxu0 0.0
    %1611 = vmatmul.mubr.f32.gmra.mrb[0].mxu0 %v1539
    %v1612 = vpop.f32.mrb[0].mxu0
    %v1613 = vadd.f32 0.0, %v1612
    %v1614 = vpop.f32.mrb[0].mxu0
    %1615 = vdwg.mxu0
    %1616 = vrot.lane.b32.xlu0 %v135, 96
    %v1617 = vpop.permute.xlu0 %1616
    %1618 = vrot.lane.b32.xlu0 %v140, 96
    %v1619 = vpop.permute.xlu0 %1618
    %1620 = vrot.lane.b32.xlu0 %v239, 96
    %v1621 = vpop.permute.xlu0 %1620
    %1622 = vrot.lane.b32.xlu0 %v244, 96
    %v1623 = vpop.permute.xlu0 %1622
    %v1624 = vsel %vm45, %v1617, 0
    %v1626 = vsel %vm45, %v1619, 0
    %v1628 = vsel %vm45, %v1621, 0
    %v1630 = vsel %vm45, %v1623, 0
    %1632 = vmatprep.subr.mxu0 0.0
    %1633 = vmatpush1.xpose.msra.mxu0 %v1628
    %1634 = vmatprep.subr.mxu0 0.0
    %1635 = vmatpush1.xpose.msra.mxu0 %v1630
    %1636 = vmatprep.subr.mxu0 0.0
    %1637 = vmatpush1.xpose.msra.mxu0 0.0
    %1638 = vmatprep.subr.mxu0 0.0
    %1639 = vmatpush1.xpose.msra.mxu0 0.0
    %1640 = vmatprep.subr.mxu0 0.0
    %1641 = vmatpush1.xpose.msra.mxu0 0.0
    %1642 = vmatprep.subr.mxu0 0.0
    %1643 = vmatpush1.xpose.msra.mxu0 0.0
    %1644 = vmatprep.subr.mxu0 0.0
    %1645 = vmatpush1.xpose.msra.mxu0 0.0
    %1646 = vmatprep.subr.mxu0 0.0
    %1647 = vmatpush1.xpose.msra.mxu0 0.0
    %1648 = vmatprep.subr.mxu0 0.0
    %1649 = vmatpush1.xpose.msra.mxu0 0.0
    %1650 = vmatprep.subr.mxu0 0.0
    %1651 = vmatpush1.xpose.msra.mxu0 0.0
    %1652 = vmatprep.subr.mxu0 0.0
    %1653 = vmatpush1.xpose.msra.mxu0 0.0
    %1654 = vmatprep.subr.mxu0 0.0
    %1655 = vmatpush1.xpose.msra.mxu0 0.0
    %1656 = vmatprep.subr.mxu0 0.0
    %1657 = vmatpush1.xpose.msra.mxu0 0.0
    %1658 = vmatprep.subr.mxu0 0.0
    %1659 = vmatpush1.xpose.msra.mxu0 0.0
    %1660 = vmatprep.subr.mxu0 0.0
    %1661 = vmatpush1.xpose.msra.mxu0 0.0
    %1662 = vmatprep.subr.mxu0 0.0
    %1663 = vmatpush1.xpose.msra.mxu0 0.0
    %1664 = vmatprep.subr.mxu0 0.0
    %1665 = vmatpush1.xpose.msra.mxu0 0.0
    %1666 = vmatprep.subr.mxu0 0.0
    %1667 = vmatpush1.xpose.msra.mxu0 0.0
    %1668 = vmatprep.subr.mxu0 0.0
    %1669 = vmatpush1.xpose.msra.mxu0 0.0
    %1670 = vmatprep.subr.mxu0 0.0
    %1671 = vmatpush1.xpose.msra.mxu0 0.0
    %1672 = vmatprep.subr.mxu0 0.0
    %1673 = vmatpush1.xpose.msra.mxu0 0.0
    %1674 = vmatprep.subr.mxu0 0.0
    %1675 = vmatpush1.xpose.msra.mxu0 0.0
    %1676 = vmatprep.subr.mxu0 0.0
    %1677 = vmatpush1.xpose.msra.mxu0 0.0
    %1678 = vmatprep.subr.mxu0 0.0
    %1679 = vmatpush1.xpose.msra.mxu0 0.0
    %1680 = vmatprep.subr.mxu0 0.0
    %1681 = vmatpush1.xpose.msra.mxu0 0.0
    %1682 = vmatprep.subr.mxu0 0.0
    %1683 = vmatpush1.xpose.msra.mxu0 0.0
    %1684 = vmatprep.subr.mxu0 0.0
    %1685 = vmatpush1.xpose.msra.mxu0 0.0
    %1686 = vmatprep.subr.mxu0 0.0
    %1687 = vmatpush1.xpose.msra.mxu0 0.0
    %1688 = vmatprep.subr.mxu0 0.0
    %1689 = vmatpush1.xpose.msra.mxu0 0.0
    %1690 = vmatprep.subr.mxu0 0.0
    %1691 = vmatpush1.xpose.msra.mxu0 0.0
    %1692 = vmatprep.subr.mxu0 0.0
    %1693 = vmatpush1.xpose.msra.mxu0 0.0
    %1694 = vmatprep.subr.mxu0 0.0
    %1695 = vmatpush1.xpose.msra.mxu0 0.0
    %1696 = vmatprep.mubr.f32.mxu0 0.0
    %1697 = vmatmul.mubr.f32.gmra.mrb[0].mxu0 %v1624
    %v1698 = vpop.f32.mrb[0].mxu0
    %v1699 = vadd.f32 0.0, %v1698
    %v1700 = vpop.f32.mrb[0].mxu0
    %1701 = vmatprep.mubr.f32.mxu0 0.0
    %1702 = vmatmul.mubr.f32.gmra.mrb[0].mxu0 %v1626
    %v1703 = vpop.f32.mrb[0].mxu0
    %v1704 = vadd.f32 0.0, %v1703
    %v1705 = vpop.f32.mrb[0].mxu0
    %1706 = vdwg.mxu0
    %v1707 = vmul.f32 %v1699, 0.17677669
    %v1708 = vmul.f32 %v1704, 0.17677669
    %v1709 = vsel %vm354, %v1707, -inf
    %v1710 = vsel %vm354, %v1708, -inf
    %v1711 = vmax.f32 %v1709, %v1710
    %1712 = vmax.xlane.f32.xlu0 %v1711
    %v1713 = vpop.xlane.xlu0 %1712
    %v1714 = vrot.slane %v1713, 4
    %v1715 = vmax.f32 %v1713, %v1714
    %v1716 = vrot.slane %v1715, 2
    %v1717 = vmax.f32 %v1715, %v1716
    %v1718 = vrot.slane %v1717, 1
    %v1719 = vmax.f32 %v1717, %v1718
    %s1720 = vtos %v1719
    %v1721 = vstv %s1720
    %v1722 = vsub.f32 %v1707, %v1721
    %v1723 = vsub.f32 %v1708, %v1721
    %v1724 = vmul.f32 %v1722, 1.442695
    %v1725 = vpow.pop %v1724
    %v1726 = vmul.f32 %v1723, 1.442695
    %v1727 = vpow.pop %v1726
    %v1728 = vsel %vm354, %v1725, 0.0
    %1729 = vadd.xlane.f32.xlu0 %v1728
    %v1730 = vpop.xlane.xlu0 %1729
    %v1731 = vsel %vm354, %v1727, 0.0
    %1732 = vadd.xlane.f32.xlu0 %v1731
    %v1733 = vpop.xlane.xlu0 %1732
    %v1734 = vrcp.pop %v1730
    %v1735 = vrcp.pop %v1733
    %v1736 = vadd.f32 %v1728, %v1731
    %v1737 = vrot.slane %v1736, 4
    %v1738 = vadd.f32 %v1736, %v1737
    %v1739 = vrot.slane %v1738, 2
    %v1740 = vadd.f32 %v1738, %v1739
    %v1741 = vrot.slane %v1740, 1
    %v1742 = vadd.f32 %v1740, %v1741
    %v1743 = vrcp.pop %v1742
    %v1744 = vmul.f32 %v1725, %v1734
    %v1745 = vmul.f32 %v1727, %v1735
    %v1746 = vmul.f32 %v1725, %v1743
    %v1747 = vmul.f32 %v1727, %v1743
    %1748 = vrot.lane.b32.xlu0 %v239, 32
    %v1749 = vpop.permute.xlu0 %1748
    %1750 = vrot.lane.b32.xlu0 %v244, 32
    %v1751 = vpop.permute.xlu0 %1750
    %v1755 = vsel %vm354, %v1744, 0
    %v1758 = vsel %vm354, %v1745, 0
    %1760 = vmatprep.subr.mxu0 0.0
    %1761 = vmatpush1.msra.mxu0 %v1749
    %1762 = vmatprep.subr.mxu0 0.0
    %1763 = vmatpush1.msra.mxu0 %v1751
    %1764 = vmatprep.subr.mxu0 0.0
    %1765 = vmatpush1.msra.mxu0 0.0
    %1766 = vmatprep.subr.mxu0 0.0
    %1767 = vmatpush1.msra.mxu0 0.0
    %1768 = vmatprep.subr.mxu0 0.0
    %1769 = vmatpush1.msra.mxu0 0.0
    %1770 = vmatprep.subr.mxu0 0.0
    %1771 = vmatpush1.msra.mxu0 0.0
    %1772 = vmatprep.subr.mxu0 0.0
    %1773 = vmatpush1.msra.mxu0 0.0
    %1774 = vmatprep.subr.mxu0 0.0
    %1775 = vmatpush1.msra.mxu0 0.0
    %1776 = vmatprep.subr.mxu0 0.0
    %1777 = vmatpush1.msra.mxu0 0.0
    %1778 = vmatprep.subr.mxu0 0.0
    %1779 = vmatpush1.msra.mxu0 0.0
    %1780 = vmatprep.subr.mxu0 0.0
    %1781 = vmatpush1.msra.mxu0 0.0
    %1782 = vmatprep.subr.mxu0 0.0
    %1783 = vmatpush1.msra.mxu0 0.0
    %1784 = vmatprep.subr.mxu0 0.0
    %1785 = vmatpush1.msra.mxu0 0.0
    %1786 = vmatprep.subr.mxu0 0.0
    %1787 = vmatpush1.msra.mxu0 0.0
    %1788 = vmatprep.subr.mxu0 0.0
    %1789 = vmatpush1.msra.mxu0 0.0
    %1790 = vmatprep.subr.mxu0 0.0
    %1791 = vmatpush1.msra.mxu0 0.0
    %1792 = vmatprep.subr.mxu0 0.0
    %1793 = vmatpush1.msra.mxu0 0.0
    %1794 = vmatprep.subr.mxu0 0.0
    %1795 = vmatpush1.msra.mxu0 0.0
    %1796 = vmatprep.subr.mxu0 0.0
    %1797 = vmatpush1.msra.mxu0 0.0
    %1798 = vmatprep.subr.mxu0 0.0
    %1799 = vmatpush1.msra.mxu0 0.0
    %1800 = vmatprep.subr.mxu0 0.0
    %1801 = vmatpush1.msra.mxu0 0.0
    %1802 = vmatprep.subr.mxu0 0.0
    %1803 = vmatpush1.msra.mxu0 0.0
    %1804 = vmatprep.subr.mxu0 0.0
    %1805 = vmatpush1.msra.mxu0 0.0
    %1806 = vmatprep.subr.mxu0 0.0
    %1807 = vmatpush1.msra.mxu0 0.0
    %1808 = vmatprep.subr.mxu0 0.0
    %1809 = vmatpush1.msra.mxu0 0.0
    %1810 = vmatprep.subr.mxu0 0.0
    %1811 = vmatpush1.msra.mxu0 0.0
    %1812 = vmatprep.subr.mxu0 0.0
    %1813 = vmatpush1.msra.mxu0 0.0
    %1814 = vmatprep.subr.mxu0 0.0
    %1815 = vmatpush1.msra.mxu0 0.0
    %1816 = vmatprep.subr.mxu0 0.0
    %1817 = vmatpush1.msra.mxu0 0.0
    %1818 = vmatprep.subr.mxu0 0.0
    %1819 = vmatpush1.msra.mxu0 0.0
    %1820 = vmatprep.subr.mxu0 0.0
    %1821 = vmatpush1.msra.mxu0 0.0
    %1822 = vmatprep.subr.mxu0 0.0
    %1823 = vmatpush1.msra.mxu0 0.0
    %1824 = vmatprep.mubr.f32.mxu0 0.0
    %1825 = vmatmul.mubr.f32.gmra.mrb[0].mxu0 %v1755
    %v1826 = vpop.f32.mrb[0].mxu0
    %v1827 = vadd.f32 0.0, %v1826
    %v1828 = vpop.f32.mrb[0].mxu0
    %1829 = vmatprep.mubr.f32.mxu0 0.0
    %1830 = vmatmul.mubr.f32.gmra.mrb[0].mxu0 %v1758
    %v1831 = vpop.f32.mrb[0].mxu0
    %v1832 = vadd.f32 0.0, %v1831
    %v1833 = vpop.f32.mrb[0].mxu0
    %1834 = vdwg.mxu0
    %1835 = vxpose.xlu0.b32.start [1/16] %v1746, 128
    %1836 = vxpose.xlu0.b32.cont [2/16] %v1747, 128
    %1837 = vxpose.xlu0.b32.cont [3/16] 0.0, 128
    %1838 = vxpose.xlu0.b32.cont [4/16] 0.0, 128
    %1839 = vxpose.xlu0.b32.cont [5/16] 0.0, 128
    %1840 = vxpose.xlu0.b32.cont [6/16] 0.0, 128
    %1841 = vxpose.xlu0.b32.cont [7/16] 0.0, 128
    %1842 = vxpose.xlu0.b32.cont [8/16] 0.0, 128
    %1843 = vxpose.xlu0.b32.cont [9/16] 0.0, 128
    %1844 = vxpose.xlu0.b32.cont [10/16] 0.0, 128
    %1845 = vxpose.xlu0.b32.cont [11/16] 0.0, 128
    %1846 = vxpose.xlu0.b32.cont [12/16] 0.0, 128
    %1847 = vxpose.xlu0.b32.cont [13/16] 0.0, 128
    %1848 = vxpose.xlu0.b32.cont [14/16] 0.0, 128
    %1849 = vxpose.xlu0.b32.cont [15/16] 0.0, 128
    %1850 = vxpose.xlu0.b32.end [16/16] 0.0, 128
    %v1851 = vpop.trf.xlu0
    %v1852 = vpop.trf.xlu0
    %v1853 = vpop.trf.xlu0
    %v1854 = vpop.trf.xlu0
    %v1855 = vpop.trf.xlu0
    %v1856 = vpop.trf.xlu0
    %v1857 = vpop.trf.xlu0
    %v1858 = vpop.trf.xlu0
    %v1859 = vpop.trf.xlu0
    %v1860 = vpop.trf.xlu0
    %v1861 = vpop.trf.xlu0
    %v1862 = vpop.trf.xlu0
    %v1863 = vpop.trf.xlu0
    %v1864 = vpop.trf.xlu0
    %v1865 = vpop.trf.xlu0
    %v1866 = vpop.trf.xlu0
    %1867 = vrot.lane.b32.xlu0 %v135, 32
    %v1868 = vpop.permute.xlu0 %1867
    %1869 = vrot.lane.b32.xlu0 %v140, 32
    %v1870 = vpop.permute.xlu0 %1869
    %v1874 = vsel %vm354, %v1851, 0
    %v1877 = vsel %vm354, %v1852, 0
    %1879 = vmatprep.subr.mxu0 0.0
    %1880 = vmatpush1.msra.mxu0 %v1868
    %1881 = vmatprep.subr.mxu0 0.0
    %1882 = vmatpush1.msra.mxu0 %v1870
    %1883 = vmatprep.subr.mxu0 0.0
    %1884 = vmatpush1.msra.mxu0 0.0
    %1885 = vmatprep.subr.mxu0 0.0
    %1886 = vmatpush1.msra.mxu0 0.0
    %1887 = vmatprep.subr.mxu0 0.0
    %1888 = vmatpush1.msra.mxu0 0.0
    %1889 = vmatprep.subr.mxu0 0.0
    %1890 = vmatpush1.msra.mxu0 0.0
    %1891 = vmatprep.subr.mxu0 0.0
    %1892 = vmatpush1.msra.mxu0 0.0
    %1893 = vmatprep.subr.mxu0 0.0
    %1894 = vmatpush1.msra.mxu0 0.0
    %1895 = vmatprep.subr.mxu0 0.0
    %1896 = vmatpush1.msra.mxu0 0.0
    %1897 = vmatprep.subr.mxu0 0.0
    %1898 = vmatpush1.msra.mxu0 0.0
    %1899 = vmatprep.subr.mxu0 0.0
    %1900 = vmatpush1.msra.mxu0 0.0
    %1901 = vmatprep.subr.mxu0 0.0
    %1902 = vmatpush1.msra.mxu0 0.0
    %1903 = vmatprep.subr.mxu0 0.0
    %1904 = vmatpush1.msra.mxu0 0.0
    %1905 = vmatprep.subr.mxu0 0.0
    %1906 = vmatpush1.msra.mxu0 0.0
    %1907 = vmatprep.subr.mxu0 0.0
    %1908 = vmatpush1.msra.mxu0 0.0
    %1909 = vmatprep.subr.mxu0 0.0
    %1910 = vmatpush1.msra.mxu0 0.0
    %1911 = vmatprep.subr.mxu0 0.0
    %1912 = vmatpush1.msra.mxu0 0.0
    %1913 = vmatprep.subr.mxu0 0.0
    %1914 = vmatpush1.msra.mxu0 0.0
    %1915 = vmatprep.subr.mxu0 0.0
    %1916 = vmatpush1.msra.mxu0 0.0
    %1917 = vmatprep.subr.mxu0 0.0
    %1918 = vmatpush1.msra.mxu0 0.0
    %1919 = vmatprep.subr.mxu0 0.0
    %1920 = vmatpush1.msra.mxu0 0.0
    %1921 = vmatprep.subr.mxu0 0.0
    %1922 = vmatpush1.msra.mxu0 0.0
    %1923 = vmatprep.subr.mxu0 0.0
    %1924 = vmatpush1.msra.mxu0 0.0
    %1925 = vmatprep.subr.mxu0 0.0
    %1926 = vmatpush1.msra.mxu0 0.0
    %1927 = vmatprep.subr.mxu0 0.0
    %1928 = vmatpush1.msra.mxu0 0.0
    %1929 = vmatprep.subr.mxu0 0.0
    %1930 = vmatpush1.msra.mxu0 0.0
    %1931 = vmatprep.subr.mxu0 0.0
    %1932 = vmatpush1.msra.mxu0 0.0
    %1933 = vmatprep.subr.mxu0 0.0
    %1934 = vmatpush1.msra.mxu0 0.0
    %1935 = vmatprep.subr.mxu0 0.0
    %1936 = vmatpush1.msra.mxu0 0.0
    %1937 = vmatprep.subr.mxu0 0.0
    %1938 = vmatpush1.msra.mxu0 0.0
    %1939 = vmatprep.subr.mxu0 0.0
    %1940 = vmatpush1.msra.mxu0 0.0
    %1941 = vmatprep.subr.mxu0 0.0
    %1942 = vmatpush1.msra.mxu0 0.0
    %1943 = vmatprep.mubr.f32.mxu0 0.0
    %1944 = vmatmul.mubr.f32.gmra.mrb[0].mxu0 %v1874
    %v1945 = vpop.f32.mrb[0].mxu0
    %v1946 = vadd.f32 0.0, %v1945
    %v1947 = vpop.f32.mrb[0].mxu0
    %1948 = vmatprep.mubr.f32.mxu0 0.0
    %1949 = vmatmul.mubr.f32.gmra.mrb[0].mxu0 %v1877
    %v1950 = vpop.f32.mrb[0].mxu0
    %v1951 = vadd.f32 0.0, %v1950
    %v1952 = vpop.f32.mrb[0].mxu0
    %1953 = vdwg.mxu0
    %v1955 = vsel %vm45, %v1827, 0
    %v1958 = vsel %vm45, %v1832, 0
    %1960 = vmatprep.subr.mxu0 0.0
    %1961 = vmatpush1.msra.mxu0 %v251
    %1962 = vmatprep.subr.mxu0 0.0
    %1963 = vmatpush1.msra.mxu0 %v252
    %1964 = vmatprep.subr.mxu0 0.0
    %1965 = vmatpush1.msra.mxu0 %v253
    %1966 = vmatprep.subr.mxu0 0.0
    %1967 = vmatpush1.msra.mxu0 %v254
    %1968 = vmatprep.subr.mxu0 0.0
    %1969 = vmatpush1.msra.mxu0 0.0
    %1970 = vmatprep.subr.mxu0 0.0
    %1971 = vmatpush1.msra.mxu0 0.0
    %1972 = vmatprep.subr.mxu0 0.0
    %1973 = vmatpush1.msra.mxu0 0.0
    %1974 = vmatprep.subr.mxu0 0.0
    %1975 = vmatpush1.msra.mxu0 0.0
    %1976 = vmatprep.subr.mxu0 0.0
    %1977 = vmatpush1.msra.mxu0 0.0
    %1978 = vmatprep.subr.mxu0 0.0
    %1979 = vmatpush1.msra.mxu0 0.0
    %1980 = vmatprep.subr.mxu0 0.0
    %1981 = vmatpush1.msra.mxu0 0.0
    %1982 = vmatprep.subr.mxu0 0.0
    %1983 = vmatpush1.msra.mxu0 0.0
    %1984 = vmatprep.subr.mxu0 0.0
    %1985 = vmatpush1.msra.mxu0 0.0
    %1986 = vmatprep.subr.mxu0 0.0
    %1987 = vmatpush1.msra.mxu0 0.0
    %1988 = vmatprep.subr.mxu0 0.0
    %1989 = vmatpush1.msra.mxu0 0.0
    %1990 = vmatprep.subr.mxu0 0.0
    %1991 = vmatpush1.msra.mxu0 0.0
    %1992 = vmatprep.subr.mxu0 0.0
    %1993 = vmatpush1.msra.mxu0 0.0
    %1994 = vmatprep.subr.mxu0 0.0
    %1995 = vmatpush1.msra.mxu0 0.0
    %1996 = vmatprep.subr.mxu0 0.0
    %1997 = vmatpush1.msra.mxu0 0.0
    %1998 = vmatprep.subr.mxu0 0.0
    %1999 = vmatpush1.msra.mxu0 0.0
    %2000 = vmatprep.subr.mxu0 0.0
    %2001 = vmatpush1.msra.mxu0 0.0
    %2002 = vmatprep.subr.mxu0 0.0
    %2003 = vmatpush1.msra.mxu0 0.0
    %2004 = vmatprep.subr.mxu0 0.0
    %2005 = vmatpush1.msra.mxu0 0.0
    %2006 = vmatprep.subr.mxu0 0.0
    %2007 = vmatpush1.msra.mxu0 0.0
    %2008 = vmatprep.subr.mxu0 0.0
    %2009 = vmatpush1.msra.mxu0 0.0
    %2010 = vmatprep.subr.mxu0 0.0
    %2011 = vmatpush1.msra.mxu0 0.0
    %2012 = vmatprep.subr.mxu0 0.0
    %2013 = vmatpush1.msra.mxu0 0.0
    %2014 = vmatprep.subr.mxu0 0.0
    %2015 = vmatpush1.msra.mxu0 0.0
    %2016 = vmatprep.subr.mxu0 0.0
    %2017 = vmatpush1.msra.mxu0 0.0
    %2018 = vmatprep.subr.mxu0 0.0
    %2019 = vmatpush1.msra.mxu0 0.0
    %2020 = vmatprep.subr.mxu0 0.0
    %2021 = vmatpush1.msra.mxu0 0.0
    %2022 = vmatprep.subr.mxu0 0.0
    %2023 = vmatpush1.msra.mxu0 0.0
    %2024 = vmatprep.mubr.f32.mxu0 0.0
    %2025 = vmatmul.mubr.f32.gmra.mrb[0].mxu0 %v1955
    %v2026 = vpop.f32.mrb[0].mxu0
    %v2027 = vadd.f32 0.0, %v2026
    %v2028 = vpop.f32.mrb[0].mxu0
    %2029 = vmatprep.mubr.f32.mxu0 0.0
    %2030 = vmatmul.mubr.f32.gmra.mrb[0].mxu0 %v1958
    %v2031 = vpop.f32.mrb[0].mxu0
    %v2032 = vadd.f32 0.0, %v2031
    %v2033 = vpop.f32.mrb[0].mxu0
    %2034 = vdwg.mxu0
    %v2036 = vsel %vm45, %v1489, 0
    %v2039 = vsel %vm45, %v1494, 0
    %2041 = vmatprep.subr.mxu0 0.0
    %2042 = vmatpush1.msra.mxu0 %v247
    %2043 = vmatprep.subr.mxu0 0.0
    %2044 = vmatpush1.msra.mxu0 %v248
    %2045 = vmatprep.subr.mxu0 0.0
    %2046 = vmatpush1.msra.mxu0 %v249
    %2047 = vmatprep.subr.mxu0 0.0
    %2048 = vmatpush1.msra.mxu0 %v250
    %2049 = vmatprep.subr.mxu0 0.0
    %2050 = vmatpush1.msra.mxu0 0.0
    %2051 = vmatprep.subr.mxu0 0.0
    %2052 = vmatpush1.msra.mxu0 0.0
    %2053 = vmatprep.subr.mxu0 0.0
    %2054 = vmatpush1.msra.mxu0 0.0
    %2055 = vmatprep.subr.mxu0 0.0
    %2056 = vmatpush1.msra.mxu0 0.0
    %2057 = vmatprep.subr.mxu0 0.0
    %2058 = vmatpush1.msra.mxu0 0.0
    %2059 = vmatprep.subr.mxu0 0.0
    %2060 = vmatpush1.msra.mxu0 0.0
    %2061 = vmatprep.subr.mxu0 0.0
    %2062 = vmatpush1.msra.mxu0 0.0
    %2063 = vmatprep.subr.mxu0 0.0
    %2064 = vmatpush1.msra.mxu0 0.0
    %2065 = vmatprep.subr.mxu0 0.0
    %2066 = vmatpush1.msra.mxu0 0.0
    %2067 = vmatprep.subr.mxu0 0.0
    %2068 = vmatpush1.msra.mxu0 0.0
    %2069 = vmatprep.subr.mxu0 0.0
    %2070 = vmatpush1.msra.mxu0 0.0
    %2071 = vmatprep.subr.mxu0 0.0
    %2072 = vmatpush1.msra.mxu0 0.0
    %2073 = vmatprep.subr.mxu0 0.0
    %2074 = vmatpush1.msra.mxu0 0.0
    %2075 = vmatprep.subr.mxu0 0.0
    %2076 = vmatpush1.msra.mxu0 0.0
    %2077 = vmatprep.subr.mxu0 0.0
    %2078 = vmatpush1.msra.mxu0 0.0
    %2079 = vmatprep.subr.mxu0 0.0
    %2080 = vmatpush1.msra.mxu0 0.0
    %2081 = vmatprep.subr.mxu0 0.0
    %2082 = vmatpush1.msra.mxu0 0.0
    %2083 = vmatprep.subr.mxu0 0.0
    %2084 = vmatpush1.msra.mxu0 0.0
    %2085 = vmatprep.subr.mxu0 0.0
    %2086 = vmatpush1.msra.mxu0 0.0
    %2087 = vmatprep.subr.mxu0 0.0
    %2088 = vmatpush1.msra.mxu0 0.0
    %2089 = vmatprep.subr.mxu0 0.0
    %2090 = vmatpush1.msra.mxu0 0.0
    %2091 = vmatprep.subr.mxu0 0.0
    %2092 = vmatpush1.msra.mxu0 0.0
    %2093 = vmatprep.subr.mxu0 0.0
    %2094 = vmatpush1.msra.mxu0 0.0
    %2095 = vmatprep.subr.mxu0 0.0
    %2096 = vmatpush1.msra.mxu0 0.0
    %2097 = vmatprep.subr.mxu0 0.0
    %2098 = vmatpush1.msra.mxu0 0.0
    %2099 = vmatprep.subr.mxu0 0.0
    %2100 = vmatpush1.msra.mxu0 0.0
    %2101 = vmatprep.subr.mxu0 0.0
    %2102 = vmatpush1.msra.mxu0 0.0
    %2103 = vmatprep.subr.mxu0 0.0
    %2104 = vmatpush1.msra.mxu0 0.0
    %2105 = vmatprep.mubr.f32.mxu0 0.0
    %2106 = vmatmul.mubr.f32.gmra.mrb[0].mxu0 %v2036
    %v2107 = vpop.f32.mrb[0].mxu0
    %v2108 = vadd.f32 %v2027, %v2107
    %v2109 = vpop.f32.mrb[0].mxu0
    %2110 = vmatprep.mubr.f32.mxu0 0.0
    %2111 = vmatmul.mubr.f32.gmra.mrb[0].mxu0 %v2039
    %v2112 = vpop.f32.mrb[0].mxu0
    %v2113 = vadd.f32 %v2032, %v2112
    %v2114 = vpop.f32.mrb[0].mxu0
    %2115 = vdwg.mxu0
    %v2117 = vsel %vm45, %v1946, 0
    %v2120 = vsel %vm45, %v1951, 0
    %2122 = vmatprep.subr.mxu0 0.0
    %2123 = vmatpush1.msra.mxu0 %v259
    %2124 = vmatprep.subr.mxu0 0.0
    %2125 = vmatpush1.msra.mxu0 %v260
    %2126 = vmatprep.subr.mxu0 0.0
    %2127 = vmatpush1.msra.mxu0 %v261
    %2128 = vmatprep.subr.mxu0 0.0
    %2129 = vmatpush1.msra.mxu0 %v262
    %2130 = vmatprep.subr.mxu0 0.0
    %2131 = vmatpush1.msra.mxu0 0.0
    %2132 = vmatprep.subr.mxu0 0.0
    %2133 = vmatpush1.msra.mxu0 0.0
    %2134 = vmatprep.subr.mxu0 0.0
    %2135 = vmatpush1.msra.mxu0 0.0
    %2136 = vmatprep.subr.mxu0 0.0
    %2137 = vmatpush1.msra.mxu0 0.0
    %2138 = vmatprep.subr.mxu0 0.0
    %2139 = vmatpush1.msra.mxu0 0.0
    %2140 = vmatprep.subr.mxu0 0.0
    %2141 = vmatpush1.msra.mxu0 0.0
    %2142 = vmatprep.subr.mxu0 0.0
    %2143 = vmatpush1.msra.mxu0 0.0
    %2144 = vmatprep.subr.mxu0 0.0
    %2145 = vmatpush1.msra.mxu0 0.0
    %2146 = vmatprep.subr.mxu0 0.0
    %2147 = vmatpush1.msra.mxu0 0.0
    %2148 = vmatprep.subr.mxu0 0.0
    %2149 = vmatpush1.msra.mxu0 0.0
    %2150 = vmatprep.subr.mxu0 0.0
    %2151 = vmatpush1.msra.mxu0 0.0
    %2152 = vmatprep.subr.mxu0 0.0
    %2153 = vmatpush1.msra.mxu0 0.0
    %2154 = vmatprep.subr.mxu0 0.0
    %2155 = vmatpush1.msra.mxu0 0.0
    %2156 = vmatprep.subr.mxu0 0.0
    %2157 = vmatpush1.msra.mxu0 0.0
    %2158 = vmatprep.subr.mxu0 0.0
    %2159 = vmatpush1.msra.mxu0 0.0
    %2160 = vmatprep.subr.mxu0 0.0
    %2161 = vmatpush1.msra.mxu0 0.0
    %2162 = vmatprep.subr.mxu0 0.0
    %2163 = vmatpush1.msra.mxu0 0.0
    %2164 = vmatprep.subr.mxu0 0.0
    %2165 = vmatpush1.msra.mxu0 0.0
    %2166 = vmatprep.subr.mxu0 0.0
    %2167 = vmatpush1.msra.mxu0 0.0
    %2168 = vmatprep.subr.mxu0 0.0
    %2169 = vmatpush1.msra.mxu0 0.0
    %2170 = vmatprep.subr.mxu0 0.0
    %2171 = vmatpush1.msra.mxu0 0.0
    %2172 = vmatprep.subr.mxu0 0.0
    %2173 = vmatpush1.msra.mxu0 0.0
    %2174 = vmatprep.subr.mxu0 0.0
    %2175 = vmatpush1.msra.mxu0 0.0
    %2176 = vmatprep.subr.mxu0 0.0
    %2177 = vmatpush1.msra.mxu0 0.0
    %2178 = vmatprep.subr.mxu0 0.0
    %2179 = vmatpush1.msra.mxu0 0.0
    %2180 = vmatprep.subr.mxu0 0.0
    %2181 = vmatpush1.msra.mxu0 0.0
    %2182 = vmatprep.subr.mxu0 0.0
    %2183 = vmatpush1.msra.mxu0 0.0
    %2184 = vmatprep.subr.mxu0 0.0
    %2185 = vmatpush1.msra.mxu0 0.0
    %2186 = vmatprep.mubr.f32.mxu0 0.0
    %2187 = vmatmul.mubr.f32.gmra.mrb[0].mxu0 %v2117
    %v2188 = vpop.f32.mrb[0].mxu0
    %v2189 = vadd.f32 0.0, %v2188
    %v2190 = vpop.f32.mrb[0].mxu0
    %2191 = vmatprep.mubr.f32.mxu0 0.0
    %2192 = vmatmul.mubr.f32.gmra.mrb[0].mxu0 %v2120
    %v2193 = vpop.f32.mrb[0].mxu0
    %v2194 = vadd.f32 0.0, %v2193
    %v2195 = vpop.f32.mrb[0].mxu0
    %2196 = vdwg.mxu0
    %v2198 = vsel %vm45, %v1608, 0
    %v2201 = vsel %vm45, %v1613, 0
    %2203 = vmatprep.subr.mxu0 0.0
    %2204 = vmatpush1.msra.mxu0 %v255
    %2205 = vmatprep.subr.mxu0 0.0
    %2206 = vmatpush1.msra.mxu0 %v256
    %2207 = vmatprep.subr.mxu0 0.0
    %2208 = vmatpush1.msra.mxu0 %v257
    %2209 = vmatprep.subr.mxu0 0.0
    %2210 = vmatpush1.msra.mxu0 %v258
    %2211 = vmatprep.subr.mxu0 0.0
    %2212 = vmatpush1.msra.mxu0 0.0
    %2213 = vmatprep.subr.mxu0 0.0
    %2214 = vmatpush1.msra.mxu0 0.0
    %2215 = vmatprep.subr.mxu0 0.0
    %2216 = vmatpush1.msra.mxu0 0.0
    %2217 = vmatprep.subr.mxu0 0.0
    %2218 = vmatpush1.msra.mxu0 0.0
    %2219 = vmatprep.subr.mxu0 0.0
    %2220 = vmatpush1.msra.mxu0 0.0
    %2221 = vmatprep.subr.mxu0 0.0
    %2222 = vmatpush1.msra.mxu0 0.0
    %2223 = vmatprep.subr.mxu0 0.0
    %2224 = vmatpush1.msra.mxu0 0.0
    %2225 = vmatprep.subr.mxu0 0.0
    %2226 = vmatpush1.msra.mxu0 0.0
    %2227 = vmatprep.subr.mxu0 0.0
    %2228 = vmatpush1.msra.mxu0 0.0
    %2229 = vmatprep.subr.mxu0 0.0
    %2230 = vmatpush1.msra.mxu0 0.0
    %2231 = vmatprep.subr.mxu0 0.0
    %2232 = vmatpush1.msra.mxu0 0.0
    %2233 = vmatprep.subr.mxu0 0.0
    %2234 = vmatpush1.msra.mxu0 0.0
    %2235 = vmatprep.subr.mxu0 0.0
    %2236 = vmatpush1.msra.mxu0 0.0
    %2237 = vmatprep.subr.mxu0 0.0
    %2238 = vmatpush1.msra.mxu0 0.0
    %2239 = vmatprep.subr.mxu0 0.0
    %2240 = vmatpush1.msra.mxu0 0.0
    %2241 = vmatprep.subr.mxu0 0.0
    %2242 = vmatpush1.msra.mxu0 0.0
    %2243 = vmatprep.subr.mxu0 0.0
    %2244 = vmatpush1.msra.mxu0 0.0
    %2245 = vmatprep.subr.mxu0 0.0
    %2246 = vmatpush1.msra.mxu0 0.0
    %2247 = vmatprep.subr.mxu0 0.0
    %2248 = vmatpush1.msra.mxu0 0.0
    %2249 = vmatprep.subr.mxu0 0.0
    %2250 = vmatpush1.msra.mxu0 0.0
    %2251 = vmatprep.subr.mxu0 0.0
    %2252 = vmatpush1.msra.mxu0 0.0
    %2253 = vmatprep.subr.mxu0 0.0
    %2254 = vmatpush1.msra.mxu0 0.0
    %2255 = vmatprep.subr.mxu0 0.0
    %2256 = vmatpush1.msra.mxu0 0.0
    %2257 = vmatprep.subr.mxu0 0.0
    %2258 = vmatpush1.msra.mxu0 0.0
    %2259 = vmatprep.subr.mxu0 0.0
    %2260 = vmatpush1.msra.mxu0 0.0
    %2261 = vmatprep.subr.mxu0 0.0
    %2262 = vmatpush1.msra.mxu0 0.0
    %2263 = vmatprep.subr.mxu0 0.0
    %2264 = vmatpush1.msra.mxu0 0.0
    %2265 = vmatprep.subr.mxu0 0.0
    %2266 = vmatpush1.msra.mxu0 0.0
    %2267 = vmatprep.mubr.f32.mxu0 0.0
    %2268 = vmatmul.mubr.f32.gmra.mrb[0].mxu0 %v2198
    %v2269 = vpop.f32.mrb[0].mxu0
    %v2270 = vadd.f32 %v2189, %v2269
    %v2271 = vpop.f32.mrb[0].mxu0
    %2272 = vmatprep.mubr.f32.mxu0 0.0
    %2273 = vmatmul.mubr.f32.gmra.mrb[0].mxu0 %v2201
    %v2274 = vpop.f32.mrb[0].mxu0
    %v2275 = vadd.f32 %v2194, %v2274
    %v2276 = vpop.f32.mrb[0].mxu0
    %2277 = vdwg.mxu0
    %v2278 = vadd.f32 %v2108, %v1266
    %v2279 = vadd.f32 %v2113, %v1266
    %s2280 = scalar_lea.vmem [#allocation2], 16
    %2281 = vst.msk [vmem:[%s2280] sm:$0xff] %vm45, %v2278
    %2282 = vst.msk [vmem:[%s2280 + $0x8] sm:$0xff] %vm45, %v2279
    %v2283 = vadd.f32 %v2270, %v1276
    %v2284 = vadd.f32 %v2275, %v1276
    %s2285 = scalar_lea.vmem [#allocation4], 16
    %2286 = vst.msk [vmem:[%s2285] sm:$0xff] %vm149, %v2283
    %2287 = vst.msk [vmem:[%s2285 + $0x8] sm:$0xff] %vm149, %v2284
    // Predicated region
    $region34: #{tpu_custom_call.1} parent=1 // pred_check
      _
    $region35: #{tpu_custom_call.1} parent=1 // pred_check_branch
      %2289 = sbr.rel (0) target = $region37
    $region36: #{tpu_custom_call.1} parent=1 // pred_region
      %s2291 = ssub.s32 512, 512
      %2292 = vsyncadd [#allocation3], %s2291
      %s2293 = sshll.u32 [#allocation2], 4
      %s2294 = int_to_ptr.vmem [resolvable:$true] %s2293
      %2299 = dma.vmem_to_hbm [thread:$0]  %s2294, 512, %s8, [#allocation3], 128, 128, 8
    $region37: #{tpu_custom_call.1} parent=1 // pred_fallthru
      _
    // Predicated region
    $region38: #{tpu_custom_call.1} parent=1 // pred_check
      _
    $region39: #{tpu_custom_call.1} parent=1 // pred_check_branch
      %2301 = sbr.rel (0) target = $region41
    $region40: #{tpu_custom_call.1} parent=1 // pred_region
      %s2303 = ssub.s32 512, 512
      %2304 = vsyncadd [#allocation5], %s2303
      %s2305 = sshll.u32 [#allocation4], 4
      %s2306 = int_to_ptr.vmem [resolvable:$true] %s2305
      %2311 = dma.vmem_to_hbm [thread:$0]  %s2306, 512, %s9, [#allocation5], 128, 128, 8
    $region41: #{tpu_custom_call.1} parent=1 // pred_fallthru
      _
    // Predicated region
    $region42: #{tpu_custom_call.1} parent=1 // pred_check
      _
    $region43: #{tpu_custom_call.1} parent=1 // pred_check_branch
      %2313 = sbr.rel (0) target = $region45
    $region44: #{tpu_custom_call.1} parent=1 // pred_region
      %2314 = dma.done [#allocation3], 512
    $region45: #{tpu_custom_call.1} parent=1 // pred_fallthru
      _
    // Predicated region
    $region46: #{tpu_custom_call.1} parent=1 // pred_check
      _
    $region47: #{tpu_custom_call.1} parent=1 // pred_check_branch
      %2316 = sbr.rel (0) target = $region49
    $region48: #{tpu_custom_call.1} parent=1 // pred_region
      %2317 = dma.done [#allocation5], 512
    $region49: #{tpu_custom_call.1} parent=1 // pred_fallthru
      _
    %2318 = vsyncpa [#allocation3], 1
    %2319 = vsyncpa [#allocation5], 1

</llo_original>
